<compile_context>
chip_gen: v7x
topology: tpu7x:2x2x1
jax: 0.10.0
libtpu: 0.0.40
codegen_flags: <defaults>
</compile_context>

<pallas_src>
import jax
import jax.numpy as jnp
from jax import lax
from jax.experimental import pallas as pl
from jax.experimental.pallas import tpu as pltpu


VOCAB = 27
VOCAB_PAD = 32           # embedding table padded to 32 rows (zeros) for the
                         # in-kernel one-hot gather matmul
EMBED_DIM = 128          # == LSTM input_size


# --------------------------------------------------------------------------
# Fused Pallas kernel: embedding + all LSTM layers + classifier in one call
# --------------------------------------------------------------------------
def make_fused_lstm_kernel(T, B, H, num_layers):
    """Kernel signature:
       kernel(tok, emb, wih0, whh0, b0, [w_l, b_l]*(L-1), cls_w, cls_b, out)
    """

    def kernel(*refs):
        tok_ref = refs[0]                      # (T*B, 1) int32, time-major
        emb_ref = refs[1]                      # (VOCAB_PAD, D) f32
        wih0_ref = refs[2]                     # (D, 4H)  (i/f/o cols * 0.5)
        whh0_ref = refs[3]                     # (H, 4H)  (i/f/o cols * 0.5)
        b0_ref = refs[4]                       # (1, 4H)
        deep = refs[5:5 + 2 * (num_layers - 1)]            # (w:(2H,4H), b:(1,4H)) per deep layer
        clsw_ref = refs[5 + 2 * (num_layers - 1)]           # (1, H)  VMEM
        clsb_ref = refs[6 + 2 * (num_layers - 1)]           # (1, 1)  SMEM scalar
        out_ref = refs[7 + 2 * (num_layers - 1)]            # (1, B)  lane-dense

        # ---- Embedding gather fused in-kernel: one-hot MXU matmul ----------
        vocab_ids = lax.broadcasted_iota(jnp.int32, (1, VOCAB_PAD), 1)
        onehot = (tok_ref[...] == vocab_ids).astype(jnp.float32)        # (T*B, 32)
        x = jnp.dot(onehot, emb_ref[...],
                    preferred_element_type=jnp.float32)                 # (T*B, D)

        # ---- Hoisted, time-parallel layer-0 input projection ---------------
        gx0 = jnp.dot(x, wih0_ref[...],
                      preferred_element_type=jnp.float32) + b0_ref[...]  # (T*B, 4H)

        whh0 = whh0_ref[...]
        deep_w = [deep[2 * i][...] for i in range(num_layers - 1)]
        deep_b = [deep[2 * i + 1][...] for i in range(num_layers - 1)]

        def cell(pre, c):
            # i/f/o preactivation columns arrive pre-scaled by 0.5, so ONE
            # full-width tanh + a VPU FMA recovers all three sigmoids
            # (sigmoid(z) = 0.5*tanh(z/2) + 0.5); g reuses the same tanh.
            th = jnp.tanh(pre)                           # (B, 4H), single EUP launch
            sg = 0.5 * th + 0.5
            i_g = sg[:, 0 * H:1 * H]
            f_g = sg[:, 1 * H:2 * H]
            g_g = th[:, 2 * H:3 * H]
            o_g = sg[:, 3 * H:4 * H]
            c_new = f_g * c + i_g * g_g
            h_new = o_g * jnp.tanh(c_new)
            return h_new, c_new

        h = [jnp.zeros((B, H), jnp.float32) for _ in range(num_layers)]
        c = [jnp.zeros((B, H), jnp.float32) for _ in range(num_layers)]

        for t in range(T):                     # fully unrolled; layers wavefronted
            # layer 0, step t (input projection already hoisted)
            pre0 = gx0[t * B:(t + 1) * B, :] + jnp.dot(
                h[0], whh0, preferred_element_type=jnp.float32)          # (B, 4H)
            h[0], c[0] = cell(pre0, c[0])
            # deeper layers, step t: single packed [h_below | h_self] matmul
            for l in range(1, num_layers):
                hcat = jnp.concatenate([h[l - 1], h[l]], axis=-1)        # (B, 2H)
                pre = jnp.dot(hcat, deep_w[l - 1],
                              preferred_element_type=jnp.float32) + deep_b[l - 1]
                h[l], c[l] = cell(pre, c[l])

        # ---- Classifier on last layer's last-step hidden state -------------
        # Lane-dense (1, B) logits: contract over H without transposing h.
        logit = lax.dot_general(clsw_ref[...], h[-1],
                                (((1,), (1,)), ((), ())),
                                preferred_element_type=jnp.float32)       # (1, B)
        z = logit + clsb_ref[0, 0]
        out_ref[...] = 0.5 * jnp.tanh(0.5 * z) + 0.5      # exact sigmoid, no divide

    return kernel


# --------------------------------------------------------------------------
# Wrapper calling pallas_call (single fused launch, no grid)
# --------------------------------------------------------------------------
def lstm_forward(kparams, tokens):
    """tokens: (B, T) int32 in [0, VOCAB). Returns (B,) sigmoid probabilities."""
    B, T = tokens.shape
    num_layers = 1 + len(kparams["deep"])
    H = kparams["whh0"].shape[0]

    # Only remaining wrapper-side data op: a 64-byte token transpose to
    # time-major (T*B, 1); the 128-wide embedding gather happens in-kernel.
    tok_tm = jnp.transpose(tokens).reshape(T * B, 1).astype(jnp.int32)

    flat = [tok_tm, kparams["emb"], kparams["wih0"], kparams["whh0"], kparams["b0"]]
    for lyr in kparams["deep"]:
        flat += [lyr["w"], lyr["b"]]
    flat += [kparams["cls_w"], kparams["cls_b"]]

    in_specs = (
        [pl.BlockSpec(memory_space=pltpu.MemorySpace.VMEM)] * (len(flat) - 1)
        + [pl.BlockSpec(memory_space=pltpu.MemorySpace.SMEM)]   # (1,1) classifier bias
    )

    out = pl.pallas_call(
        make_fused_lstm_kernel(T, B, H, num_layers),
        out_shape=jax.ShapeDtypeStruct((1, B), jnp.float32),    # lane-dense
        in_specs=in_specs,
        out_specs=pl.BlockSpec(memory_space=pltpu.MemorySpace.VMEM),
    )(*flat)
    return out[0]                                               # (B,)


# --------------------------------------------------------------------------
# Parameter init (deterministic, PyTorch-like scales), kernel-ready packing:
#   * embedding padded 27 -> 32 rows (zeros; never indexed)
#   * gate columns [i|f|o] pre-scaled by 0.5 (sigmoid-via-tanh trick)
#   * biases pre-summed (b_ih + b_hh)
#   * deep layers: W_ih / W_hh stacked into one (2H, 4H) matrix
# --------------------------------------------------------------------------
def init_params(key, input_size, hidden_size, num_layers):
    H = hidden_size
    ks = jax.random.split(key, 3 + 4 * num_layers)
    ki = iter(ks)

    # nn.Embedding(27, 128): N(0, 1)
    emb = jax.random.normal(next(ki), (VOCAB, EMBED_DIM), jnp.float32)
    emb_pad = jnp.zeros((VOCAB_PAD, EMBED_DIM), jnp.float32).at[:VOCAB].set(emb)

    # 0.5 on i/f/o gate columns, 1.0 on g columns (gate order [i|f|g|o]).
    scale = jnp.concatenate([jnp.full((H,), 0.5, jnp.float32),
                             jnp.full((H,), 0.5, jnp.float32),
                             jnp.ones((H,), jnp.float32),
                             jnp.full((H,), 0.5, jnp.float32)])

    k = 1.0 / jnp.sqrt(hidden_size)

    def unif(kk, shape):
        return jax.random.uniform(kk, shape, jnp.float32, -k, k)

    layers = []
    for l in range(num_layers):
        in_dim = input_size if l == 0 else hidden_size
        wih_t = unif(next(ki), (in_dim, 4 * H))                 # (Din, 4H)
        whh_t = unif(next(ki), (H, 4 * H))                      # (H, 4H)
        b_ih = unif(next(ki), (4 * H,))
        b_hh = unif(next(ki), (4 * H,))
        layers.append((wih_t * scale, whh_t * scale,
                       ((b_ih + b_hh) * scale)[None, :]))

    params = {
        "emb": emb_pad,
        "wih0": layers[0][0],
        "whh0": layers[0][1],
        "b0": layers[0][2],
        "deep": [{"w": jnp.concatenate([w_ih, w_hh], axis=0), "b": b}
                 for (w_ih, w_hh, b) in layers[1:]],
        # classifier Linear(H, 1) as a (1, H) row + (1, 1) bias
        "cls_w": unif(next(ki), (1, H)),
        "cls_b": unif(next(ki), (1, 1)),
    }
    # NOTE: self.fc (Linear(103, H)) and self.nrom (BatchNorm1d(32)) are defined
    # in the PyTorch module but unused in forward(), so they are omitted.
    return params


# --------------------------------------------------------------------------
if __name__ == "__main__":
    input_size = EMBED_DIM   # 128 (embedding dim feeds the LSTM)
    hidden_size = 32
    num_layers = 2
    B, T = 2, 8

    key = jax.random.PRNGKey(0)
    k_params, k_tokens = jax.random.split(key)
    params = init_params(k_params, input_size, hidden_size, num_layers)
    tokens = jax.random.randint(k_tokens, (B, T), 0, VOCAB, dtype=jnp.int32)

    out = jax.jit(lstm_forward)(params, tokens)
    out = jax.block_until_ready(out)
    assert out.shape == (B,) and out.dtype == jnp.float32
    assert bool(jnp.all(jnp.isfinite(out))) and bool(jnp.all((out >= 0) & (out <= 1)))
    print("KERNEL_OK")
</pallas_src>

<mosaic_0001>
module attributes {stable_mosaic.version = 11 : i64} {
  func.func @kernel(%arg0: memref<16x1xi32, #tpu.memory_space<vmem>>, %arg1: memref<32x128xf32, #tpu.memory_space<vmem>>, %arg2: memref<128x128xf32, #tpu.memory_space<vmem>>, %arg3: memref<32x128xf32, #tpu.memory_space<vmem>>, %arg4: memref<1x128xf32, #tpu.memory_space<vmem>>, %arg5: memref<64x128xf32, #tpu.memory_space<vmem>>, %arg6: memref<1x128xf32, #tpu.memory_space<vmem>>, %arg7: memref<1x32xf32, #tpu.memory_space<vmem>>, %arg8: memref<1x1xf32, #tpu.memory_space<smem>>, %arg9: memref<1x2xf32, #tpu.memory_space<vmem>>) attributes {dimension_semantics = [], scalar_prefetch = 0 : i64, scratch_operands = 0 : i64, tpu.core_type = #tpu.core_type<tc>} {
    %0 = tpu.iota {dimensions = array<i32: 1>} : vector<1x32xi32>
    %c0 = arith.constant 0 : index
    %c0_0 = arith.constant 0 : index
    %1 = vector.load %arg0[%c0, %c0_0] : memref<16x1xi32, #tpu.memory_space<vmem>>, vector<16x1xi32>
    %2 = vector.broadcast %1 : vector<16x1xi32> to vector<16x32xi32>
    %3 = vector.broadcast %0 : vector<1x32xi32> to vector<16x32xi32>
    %4 = arith.cmpi eq, %2, %3 : vector<16x32xi32>
    %5 = arith.extui %4 : vector<16x32xi1> to vector<16x32xi32>
    %6 = arith.sitofp %5 : vector<16x32xi32> to vector<16x32xf32>
    %c0_1 = arith.constant 0 : index
    %c0_2 = arith.constant 0 : index
    %7 = vector.load %arg1[%c0_1, %c0_2] : memref<32x128xf32, #tpu.memory_space<vmem>>, vector<32x128xf32>
    %cst = arith.constant dense<0.000000e+00> : vector<16x128xf32>
    %8 = tpu.matmul %6, %7, %cst {dimension_numbers = #tpu.dot_dimension_numbers<[1], [0], [0], [1], [0, 0, 1, 1], [], []>} : vector<16x32xf32>, vector<32x128xf32>, vector<16x128xf32> -> vector<16x128xf32>
    %c0_3 = arith.constant 0 : index
    %c0_4 = arith.constant 0 : index
    %9 = vector.load %arg2[%c0_3, %c0_4] : memref<128x128xf32, #tpu.memory_space<vmem>>, vector<128x128xf32>
    %cst_5 = arith.constant dense<0.000000e+00> : vector<16x128xf32>
    %10 = tpu.matmul %8, %9, %cst_5 {dimension_numbers = #tpu.dot_dimension_numbers<[1], [0], [0], [1], [0, 0, 1, 1], [], []>} : vector<16x128xf32>, vector<128x128xf32>, vector<16x128xf32> -> vector<16x128xf32>
    %c0_6 = arith.constant 0 : index
    %c0_7 = arith.constant 0 : index
    %11 = vector.load %arg4[%c0_6, %c0_7] : memref<1x128xf32, #tpu.memory_space<vmem>>, vector<1x128xf32>
    %12 = vector.broadcast %11 : vector<1x128xf32> to vector<16x128xf32>
    %13 = arith.addf %10, %12 : vector<16x128xf32>
    %c0_8 = arith.constant 0 : index
    %c0_9 = arith.constant 0 : index
    %14 = vector.load %arg3[%c0_8, %c0_9] : memref<32x128xf32, #tpu.memory_space<vmem>>, vector<32x128xf32>
    %c0_10 = arith.constant 0 : index
    %c0_11 = arith.constant 0 : index
    %15 = vector.load %arg5[%c0_10, %c0_11] : memref<64x128xf32, #tpu.memory_space<vmem>>, vector<64x128xf32>
    %c0_12 = arith.constant 0 : index
    %c0_13 = arith.constant 0 : index
    %16 = vector.load %arg6[%c0_12, %c0_13] : memref<1x128xf32, #tpu.memory_space<vmem>>, vector<1x128xf32>
    %cst_14 = arith.constant 0.000000e+00 : f32
    %17 = vector.broadcast %cst_14 : f32 to vector<2x32xf32>
    %cst_15 = arith.constant 0.000000e+00 : f32
    %18 = vector.broadcast %cst_15 : f32 to vector<2x32xf32>
    %cst_16 = arith.constant 0.000000e+00 : f32
    %19 = vector.broadcast %cst_16 : f32 to vector<2x32xf32>
    %cst_17 = arith.constant 0.000000e+00 : f32
    %20 = vector.broadcast %cst_17 : f32 to vector<2x32xf32>
    %21 = vector.extract_strided_slice %13 {offsets = [0, 0], sizes = [2, 128], strides = [1, 1]} : vector<16x128xf32> to vector<2x128xf32>
    %cst_18 = arith.constant dense<0.000000e+00> : vector<2x128xf32>
    %22 = tpu.matmul %17, %14, %cst_18 {dimension_numbers = #tpu.dot_dimension_numbers<[1], [0], [0], [1], [0, 0, 1, 1], [], []>} : vector<2x32xf32>, vector<32x128xf32>, vector<2x128xf32> -> vector<2x128xf32>
    %23 = arith.addf %21, %22 : vector<2x128xf32>
    %24 = math.tanh %23 : vector<2x128xf32>
    %cst_19 = arith.constant 5.000000e-01 : f32
    %25 = vector.broadcast %cst_19 : f32 to vector<2x128xf32>
    %26 = arith.mulf %25, %24 : vector<2x128xf32>
    %cst_20 = arith.constant 5.000000e-01 : f32
    %27 = vector.broadcast %cst_20 : f32 to vector<2x128xf32>
    %28 = arith.addf %26, %27 : vector<2x128xf32>
    %29 = vector.extract_strided_slice %28 {offsets = [0, 0], sizes = [2, 32], strides = [1, 1]} : vector<2x128xf32> to vector<2x32xf32>
    %30 = vector.extract_strided_slice %28 {offsets = [0, 32], sizes = [2, 32], strides = [1, 1]} : vector<2x128xf32> to vector<2x32xf32>
    %31 = vector.extract_strided_slice %24 {offsets = [0, 64], sizes = [2, 32], strides = [1, 1]} : vector<2x128xf32> to vector<2x32xf32>
    %32 = vector.extract_strided_slice %28 {offsets = [0, 96], sizes = [2, 32], strides = [1, 1]} : vector<2x128xf32> to vector<2x32xf32>
    %33 = arith.mulf %30, %19 : vector<2x32xf32>
    %34 = arith.mulf %29, %31 : vector<2x32xf32>
    %35 = arith.addf %33, %34 : vector<2x32xf32>
    %36 = math.tanh %35 : vector<2x32xf32>
    %37 = arith.mulf %32, %36 : vector<2x32xf32>
    %38 = tpu.concatenate %37, %18 in 1 : vector<2x32xf32>, vector<2x32xf32> -> vector<2x64xf32>
    %cst_21 = arith.constant dense<0.000000e+00> : vector<2x128xf32>
    %39 = tpu.matmul %38, %15, %cst_21 {dimension_numbers = #tpu.dot_dimension_numbers<[1], [0], [0], [1], [0, 0, 1, 1], [], []>} : vector<2x64xf32>, vector<64x128xf32>, vector<2x128xf32> -> vector<2x128xf32>
    %40 = vector.broadcast %16 : vector<1x128xf32> to vector<2x128xf32>
    %41 = arith.addf %39, %40 : vector<2x128xf32>
    %42 = math.tanh %41 : vector<2x128xf32>
    %cst_22 = arith.constant 5.000000e-01 : f32
    %43 = vector.broadcast %cst_22 : f32 to vector<2x128xf32>
    %44 = arith.mulf %43, %42 : vector<2x128xf32>
    %cst_23 = arith.constant 5.000000e-01 : f32
    %45 = vector.broadcast %cst_23 : f32 to vector<2x128xf32>
    %46 = arith.addf %44, %45 : vector<2x128xf32>
    %47 = vector.extract_strided_slice %46 {offsets = [0, 0], sizes = [2, 32], strides = [1, 1]} : vector<2x128xf32> to vector<2x32xf32>
    %48 = vector.extract_strided_slice %46 {offsets = [0, 32], sizes = [2, 32], strides = [1, 1]} : vector<2x128xf32> to vector<2x32xf32>
    %49 = vector.extract_strided_slice %42 {offsets = [0, 64], sizes = [2, 32], strides = [1, 1]} : vector<2x128xf32> to vector<2x32xf32>
    %50 = vector.extract_strided_slice %46 {offsets = [0, 96], sizes = [2, 32], strides = [1, 1]} : vector<2x128xf32> to vector<2x32xf32>
    %51 = arith.mulf %48, %20 : vector<2x32xf32>
    %52 = arith.mulf %47, %49 : vector<2x32xf32>
    %53 = arith.addf %51, %52 : vector<2x32xf32>
    %54 = math.tanh %53 : vector<2x32xf32>
    %55 = arith.mulf %50, %54 : vector<2x32xf32>
    %56 = vector.extract_strided_slice %13 {offsets = [2, 0], sizes = [2, 128], strides = [1, 1]} : vector<16x128xf32> to vector<2x128xf32>
    %cst_24 = arith.constant dense<0.000000e+00> : vector<2x128xf32>
    %57 = tpu.matmul %37, %14, %cst_24 {dimension_numbers = #tpu.dot_dimension_numbers<[1], [0], [0], [1], [0, 0, 1, 1], [], []>} : vector<2x32xf32>, vector<32x128xf32>, vector<2x128xf32> -> vector<2x128xf32>
    %58 = arith.addf %56, %57 : vector<2x128xf32>
    %59 = math.tanh %58 : vector<2x128xf32>
    %cst_25 = arith.constant 5.000000e-01 : f32
    %60 = vector.broadcast %cst_25 : f32 to vector<2x128xf32>
    %61 = arith.mulf %60, %59 : vector<2x128xf32>
    %cst_26 = arith.constant 5.000000e-01 : f32
    %62 = vector.broadcast %cst_26 : f32 to vector<2x128xf32>
    %63 = arith.addf %61, %62 : vector<2x128xf32>
    %64 = vector.extract_strided_slice %63 {offsets = [0, 0], sizes = [2, 32], strides = [1, 1]} : vector<2x128xf32> to vector<2x32xf32>
    %65 = vector.extract_strided_slice %63 {offsets = [0, 32], sizes = [2, 32], strides = [1, 1]} : vector<2x128xf32> to vector<2x32xf32>
    %66 = vector.extract_strided_slice %59 {offsets = [0, 64], sizes = [2, 32], strides = [1, 1]} : vector<2x128xf32> to vector<2x32xf32>
    %67 = vector.extract_strided_slice %63 {offsets = [0, 96], sizes = [2, 32], strides = [1, 1]} : vector<2x128xf32> to vector<2x32xf32>
    %68 = arith.mulf %65, %35 : vector<2x32xf32>
    %69 = arith.mulf %64, %66 : vector<2x32xf32>
    %70 = arith.addf %68, %69 : vector<2x32xf32>
    %71 = math.tanh %70 : vector<2x32xf32>
    %72 = arith.mulf %67, %71 : vector<2x32xf32>
    %73 = tpu.concatenate %72, %55 in 1 : vector<2x32xf32>, vector<2x32xf32> -> vector<2x64xf32>
    %cst_27 = arith.constant dense<0.000000e+00> : vector<2x128xf32>
    %74 = tpu.matmul %73, %15, %cst_27 {dimension_numbers = #tpu.dot_dimension_numbers<[1], [0], [0], [1], [0, 0, 1, 1], [], []>} : vector<2x64xf32>, vector<64x128xf32>, vector<2x128xf32> -> vector<2x128xf32>
    %75 = vector.broadcast %16 : vector<1x128xf32> to vector<2x128xf32>
    %76 = arith.addf %74, %75 : vector<2x128xf32>
    %77 = math.tanh %76 : vector<2x128xf32>
    %cst_28 = arith.constant 5.000000e-01 : f32
    %78 = vector.broadcast %cst_28 : f32 to vector<2x128xf32>
    %79 = arith.mulf %78, %77 : vector<2x128xf32>
    %cst_29 = arith.constant 5.000000e-01 : f32
    %80 = vector.broadcast %cst_29 : f32 to vector<2x128xf32>
    %81 = arith.addf %79, %80 : vector<2x128xf32>
    %82 = vector.extract_strided_slice %81 {offsets = [0, 0], sizes = [2, 32], strides = [1, 1]} : vector<2x128xf32> to vector<2x32xf32>
    %83 = vector.extract_strided_slice %81 {offsets = [0, 32], sizes = [2, 32], strides = [1, 1]} : vector<2x128xf32> to vector<2x32xf32>
    %84 = vector.extract_strided_slice %77 {offsets = [0, 64], sizes = [2, 32], strides = [1, 1]} : vector<2x128xf32> to vector<2x32xf32>
    %85 = vector.extract_strided_slice %81 {offsets = [0, 96], sizes = [2, 32], strides = [1, 1]} : vector<2x128xf32> to vector<2x32xf32>
    %86 = arith.mulf %83, %53 : vector<2x32xf32>
    %87 = arith.mulf %82, %84 : vector<2x32xf32>
    %88 = arith.addf %86, %87 : vector<2x32xf32>
    %89 = math.tanh %88 : vector<2x32xf32>
    %90 = arith.mulf %85, %89 : vector<2x32xf32>
    %91 = vector.extract_strided_slice %13 {offsets = [4, 0], sizes = [2, 128], strides = [1, 1]} : vector<16x128xf32> to vector<2x128xf32>
    %cst_30 = arith.constant dense<0.000000e+00> : vector<2x128xf32>
    %92 = tpu.matmul %72, %14, %cst_30 {dimension_numbers = #tpu.dot_dimension_numbers<[1], [0], [0], [1], [0, 0, 1, 1], [], []>} : vector<2x32xf32>, vector<32x128xf32>, vector<2x128xf32> -> vector<2x128xf32>
    %93 = arith.addf %91, %92 : vector<2x128xf32>
    %94 = math.tanh %93 : vector<2x128xf32>
    %cst_31 = arith.constant 5.000000e-01 : f32
    %95 = vector.broadcast %cst_31 : f32 to vector<2x128xf32>
    %96 = arith.mulf %95, %94 : vector<2x128xf32>
    %cst_32 = arith.constant 5.000000e-01 : f32
    %97 = vector.broadcast %cst_32 : f32 to vector<2x128xf32>
    %98 = arith.addf %96, %97 : vector<2x128xf32>
    %99 = vector.extract_strided_slice %98 {offsets = [0, 0], sizes = [2, 32], strides = [1, 1]} : vector<2x128xf32> to vector<2x32xf32>
    %100 = vector.extract_strided_slice %98 {offsets = [0, 32], sizes = [2, 32], strides = [1, 1]} : vector<2x128xf32> to vector<2x32xf32>
    %101 = vector.extract_strided_slice %94 {offsets = [0, 64], sizes = [2, 32], strides = [1, 1]} : vector<2x128xf32> to vector<2x32xf32>
    %102 = vector.extract_strided_slice %98 {offsets = [0, 96], sizes = [2, 32], strides = [1, 1]} : vector<2x128xf32> to vector<2x32xf32>
    %103 = arith.mulf %100, %70 : vector<2x32xf32>
    %104 = arith.mulf %99, %101 : vector<2x32xf32>
    %105 = arith.addf %103, %104 : vector<2x32xf32>
    %106 = math.tanh %105 : vector<2x32xf32>
    %107 = arith.mulf %102, %106 : vector<2x32xf32>
    %108 = tpu.concatenate %107, %90 in 1 : vector<2x32xf32>, vector<2x32xf32> -> vector<2x64xf32>
    %cst_33 = arith.constant dense<0.000000e+00> : vector<2x128xf32>
    %109 = tpu.matmul %108, %15, %cst_33 {dimension_numbers = #tpu.dot_dimension_numbers<[1], [0], [0], [1], [0, 0, 1, 1], [], []>} : vector<2x64xf32>, vector<64x128xf32>, vector<2x128xf32> -> vector<2x128xf32>
    %110 = vector.broadcast %16 : vector<1x128xf32> to vector<2x128xf32>
    %111 = arith.addf %109, %110 : vector<2x128xf32>
    %112 = math.tanh %111 : vector<2x128xf32>
    %cst_34 = arith.constant 5.000000e-01 : f32
    %113 = vector.broadcast %cst_34 : f32 to vector<2x128xf32>
    %114 = arith.mulf %113, %112 : vector<2x128xf32>
    %cst_35 = arith.constant 5.000000e-01 : f32
    %115 = vector.broadcast %cst_35 : f32 to vector<2x128xf32>
    %116 = arith.addf %114, %115 : vector<2x128xf32>
    %117 = vector.extract_strided_slice %116 {offsets = [0, 0], sizes = [2, 32], strides = [1, 1]} : vector<2x128xf32> to vector<2x32xf32>
    %118 = vector.extract_strided_slice %116 {offsets = [0, 32], sizes = [2, 32], strides = [1, 1]} : vector<2x128xf32> to vector<2x32xf32>
    %119 = vector.extract_strided_slice %112 {offsets = [0, 64], sizes = [2, 32], strides = [1, 1]} : vector<2x128xf32> to vector<2x32xf32>
    %120 = vector.extract_strided_slice %116 {offsets = [0, 96], sizes = [2, 32], strides = [1, 1]} : vector<2x128xf32> to vector<2x32xf32>
    %121 = arith.mulf %118, %88 : vector<2x32xf32>
    %122 = arith.mulf %117, %119 : vector<2x32xf32>
    %123 = arith.addf %121, %122 : vector<2x32xf32>
    %124 = math.tanh %123 : vector<2x32xf32>
    %125 = arith.mulf %120, %124 : vector<2x32xf32>
    %126 = vector.extract_strided_slice %13 {offsets = [6, 0], sizes = [2, 128], strides = [1, 1]} : vector<16x128xf32> to vector<2x128xf32>
    %cst_36 = arith.constant dense<0.000000e+00> : vector<2x128xf32>
    %127 = tpu.matmul %107, %14, %cst_36 {dimension_numbers = #tpu.dot_dimension_numbers<[1], [0], [0], [1], [0, 0, 1, 1], [], []>} : vector<2x32xf32>, vector<32x128xf32>, vector<2x128xf32> -> vector<2x128xf32>
    %128 = arith.addf %126, %127 : vector<2x128xf32>
    %129 = math.tanh %128 : vector<2x128xf32>
    %cst_37 = arith.constant 5.000000e-01 : f32
    %130 = vector.broadcast %cst_37 : f32 to vector<2x128xf32>
    %131 = arith.mulf %130, %129 : vector<2x128xf32>
    %cst_38 = arith.constant 5.000000e-01 : f32
    %132 = vector.broadcast %cst_38 : f32 to vector<2x128xf32>
    %133 = arith.addf %131, %132 : vector<2x128xf32>
    %134 = vector.extract_strided_slice %133 {offsets = [0, 0], sizes = [2, 32], strides = [1, 1]} : vector<2x128xf32> to vector<2x32xf32>
    %135 = vector.extract_strided_slice %133 {offsets = [0, 32], sizes = [2, 32], strides = [1, 1]} : vector<2x128xf32> to vector<2x32xf32>
    %136 = vector.extract_strided_slice %129 {offsets = [0, 64], sizes = [2, 32], strides = [1, 1]} : vector<2x128xf32> to vector<2x32xf32>
    %137 = vector.extract_strided_slice %133 {offsets = [0, 96], sizes = [2, 32], strides = [1, 1]} : vector<2x128xf32> to vector<2x32xf32>
    %138 = arith.mulf %135, %105 : vector<2x32xf32>
    %139 = arith.mulf %134, %136 : vector<2x32xf32>
    %140 = arith.addf %138, %139 : vector<2x32xf32>
    %141 = math.tanh %140 : vector<2x32xf32>
    %142 = arith.mulf %137, %141 : vector<2x32xf32>
    %143 = tpu.concatenate %142, %125 in 1 : vector<2x32xf32>, vector<2x32xf32> -> vector<2x64xf32>
    %cst_39 = arith.constant dense<0.000000e+00> : vector<2x128xf32>
    %144 = tpu.matmul %143, %15, %cst_39 {dimension_numbers = #tpu.dot_dimension_numbers<[1], [0], [0], [1], [0, 0, 1, 1], [], []>} : vector<2x64xf32>, vector<64x128xf32>, vector<2x128xf32> -> vector<2x128xf32>
    %145 = vector.broadcast %16 : vector<1x128xf32> to vector<2x128xf32>
    %146 = arith.addf %144, %145 : vector<2x128xf32>
    %147 = math.tanh %146 : vector<2x128xf32>
    %cst_40 = arith.constant 5.000000e-01 : f32
    %148 = vector.broadcast %cst_40 : f32 to vector<2x128xf32>
    %149 = arith.mulf %148, %147 : vector<2x128xf32>
    %cst_41 = arith.constant 5.000000e-01 : f32
    %150 = vector.broadcast %cst_41 : f32 to vector<2x128xf32>
    %151 = arith.addf %149, %150 : vector<2x128xf32>
    %152 = vector.extract_strided_slice %151 {offsets = [0, 0], sizes = [2, 32], strides = [1, 1]} : vector<2x128xf32> to vector<2x32xf32>
    %153 = vector.extract_strided_slice %151 {offsets = [0, 32], sizes = [2, 32], strides = [1, 1]} : vector<2x128xf32> to vector<2x32xf32>
    %154 = vector.extract_strided_slice %147 {offsets = [0, 64], sizes = [2, 32], strides = [1, 1]} : vector<2x128xf32> to vector<2x32xf32>
    %155 = vector.extract_strided_slice %151 {offsets = [0, 96], sizes = [2, 32], strides = [1, 1]} : vector<2x128xf32> to vector<2x32xf32>
    %156 = arith.mulf %153, %123 : vector<2x32xf32>
    %157 = arith.mulf %152, %154 : vector<2x32xf32>
    %158 = arith.addf %156, %157 : vector<2x32xf32>
    %159 = math.tanh %158 : vector<2x32xf32>
    %160 = arith.mulf %155, %159 : vector<2x32xf32>
    %161 = vector.extract_strided_slice %13 {offsets = [8, 0], sizes = [2, 128], strides = [1, 1]} : vector<16x128xf32> to vector<2x128xf32>
    %cst_42 = arith.constant dense<0.000000e+00> : vector<2x128xf32>
    %162 = tpu.matmul %142, %14, %cst_42 {dimension_numbers = #tpu.dot_dimension_numbers<[1], [0], [0], [1], [0, 0, 1, 1], [], []>} : vector<2x32xf32>, vector<32x128xf32>, vector<2x128xf32> -> vector<2x128xf32>
    %163 = arith.addf %161, %162 : vector<2x128xf32>
    %164 = math.tanh %163 : vector<2x128xf32>
    %cst_43 = arith.constant 5.000000e-01 : f32
    %165 = vector.broadcast %cst_43 : f32 to vector<2x128xf32>
    %166 = arith.mulf %165, %164 : vector<2x128xf32>
    %cst_44 = arith.constant 5.000000e-01 : f32
    %167 = vector.broadcast %cst_44 : f32 to vector<2x128xf32>
    %168 = arith.addf %166, %167 : vector<2x128xf32>
    %169 = vector.extract_strided_slice %168 {offsets = [0, 0], sizes = [2, 32], strides = [1, 1]} : vector<2x128xf32> to vector<2x32xf32>
    %170 = vector.extract_strided_slice %168 {offsets = [0, 32], sizes = [2, 32], strides = [1, 1]} : vector<2x128xf32> to vector<2x32xf32>
    %171 = vector.extract_strided_slice %164 {offsets = [0, 64], sizes = [2, 32], strides = [1, 1]} : vector<2x128xf32> to vector<2x32xf32>
    %172 = vector.extract_strided_slice %168 {offsets = [0, 96], sizes = [2, 32], strides = [1, 1]} : vector<2x128xf32> to vector<2x32xf32>
    %173 = arith.mulf %170, %140 : vector<2x32xf32>
    %174 = arith.mulf %169, %171 : vector<2x32xf32>
    %175 = arith.addf %173, %174 : vector<2x32xf32>
    %176 = math.tanh %175 : vector<2x32xf32>
    %177 = arith.mulf %172, %176 : vector<2x32xf32>
    %178 = tpu.concatenate %177, %160 in 1 : vector<2x32xf32>, vector<2x32xf32> -> vector<2x64xf32>
    %cst_45 = arith.constant dense<0.000000e+00> : vector<2x128xf32>
    %179 = tpu.matmul %178, %15, %cst_45 {dimension_numbers = #tpu.dot_dimension_numbers<[1], [0], [0], [1], [0, 0, 1, 1], [], []>} : vector<2x64xf32>, vector<64x128xf32>, vector<2x128xf32> -> vector<2x128xf32>
    %180 = vector.broadcast %16 : vector<1x128xf32> to vector<2x128xf32>
    %181 = arith.addf %179, %180 : vector<2x128xf32>
    %182 = math.tanh %181 : vector<2x128xf32>
    %cst_46 = arith.constant 5.000000e-01 : f32
    %183 = vector.broadcast %cst_46 : f32 to vector<2x128xf32>
    %184 = arith.mulf %183, %182 : vector<2x128xf32>
    %cst_47 = arith.constant 5.000000e-01 : f32
    %185 = vector.broadcast %cst_47 : f32 to vector<2x128xf32>
    %186 = arith.addf %184, %185 : vector<2x128xf32>
    %187 = vector.extract_strided_slice %186 {offsets = [0, 0], sizes = [2, 32], strides = [1, 1]} : vector<2x128xf32> to vector<2x32xf32>
    %188 = vector.extract_strided_slice %186 {offsets = [0, 32], sizes = [2, 32], strides = [1, 1]} : vector<2x128xf32> to vector<2x32xf32>
    %189 = vector.extract_strided_slice %182 {offsets = [0, 64], sizes = [2, 32], strides = [1, 1]} : vector<2x128xf32> to vector<2x32xf32>
    %190 = vector.extract_strided_slice %186 {offsets = [0, 96], sizes = [2, 32], strides = [1, 1]} : vector<2x128xf32> to vector<2x32xf32>
    %191 = arith.mulf %188, %158 : vector<2x32xf32>
    %192 = arith.mulf %187, %189 : vector<2x32xf32>
    %193 = arith.addf %191, %192 : vector<2x32xf32>
    %194 = math.tanh %193 : vector<2x32xf32>
    %195 = arith.mulf %190, %194 : vector<2x32xf32>
    %196 = vector.extract_strided_slice %13 {offsets = [10, 0], sizes = [2, 128], strides = [1, 1]} : vector<16x128xf32> to vector<2x128xf32>
    %cst_48 = arith.constant dense<0.000000e+00> : vector<2x128xf32>
    %197 = tpu.matmul %177, %14, %cst_48 {dimension_numbers = #tpu.dot_dimension_numbers<[1], [0], [0], [1], [0, 0, 1, 1], [], []>} : vector<2x32xf32>, vector<32x128xf32>, vector<2x128xf32> -> vector<2x128xf32>
    %198 = arith.addf %196, %197 : vector<2x128xf32>
    %199 = math.tanh %198 : vector<2x128xf32>
    %cst_49 = arith.constant 5.000000e-01 : f32
    %200 = vector.broadcast %cst_49 : f32 to vector<2x128xf32>
    %201 = arith.mulf %200, %199 : vector<2x128xf32>
    %cst_50 = arith.constant 5.000000e-01 : f32
    %202 = vector.broadcast %cst_50 : f32 to vector<2x128xf32>
    %203 = arith.addf %201, %202 : vector<2x128xf32>
    %204 = vector.extract_strided_slice %203 {offsets = [0, 0], sizes = [2, 32], strides = [1, 1]} : vector<2x128xf32> to vector<2x32xf32>
    %205 = vector.extract_strided_slice %203 {offsets = [0, 32], sizes = [2, 32], strides = [1, 1]} : vector<2x128xf32> to vector<2x32xf32>
    %206 = vector.extract_strided_slice %199 {offsets = [0, 64], sizes = [2, 32], strides = [1, 1]} : vector<2x128xf32> to vector<2x32xf32>
    %207 = vector.extract_strided_slice %203 {offsets = [0, 96], sizes = [2, 32], strides = [1, 1]} : vector<2x128xf32> to vector<2x32xf32>
    %208 = arith.mulf %205, %175 : vector<2x32xf32>
    %209 = arith.mulf %204, %206 : vector<2x32xf32>
    %210 = arith.addf %208, %209 : vector<2x32xf32>
    %211 = math.tanh %210 : vector<2x32xf32>
    %212 = arith.mulf %207, %211 : vector<2x32xf32>
    %213 = tpu.concatenate %212, %195 in 1 : vector<2x32xf32>, vector<2x32xf32> -> vector<2x64xf32>
    %cst_51 = arith.constant dense<0.000000e+00> : vector<2x128xf32>
    %214 = tpu.matmul %213, %15, %cst_51 {dimension_numbers = #tpu.dot_dimension_numbers<[1], [0], [0], [1], [0, 0, 1, 1], [], []>} : vector<2x64xf32>, vector<64x128xf32>, vector<2x128xf32> -> vector<2x128xf32>
    %215 = vector.broadcast %16 : vector<1x128xf32> to vector<2x128xf32>
    %216 = arith.addf %214, %215 : vector<2x128xf32>
    %217 = math.tanh %216 : vector<2x128xf32>
    %cst_52 = arith.constant 5.000000e-01 : f32
    %218 = vector.broadcast %cst_52 : f32 to vector<2x128xf32>
    %219 = arith.mulf %218, %217 : vector<2x128xf32>
    %cst_53 = arith.constant 5.000000e-01 : f32
    %220 = vector.broadcast %cst_53 : f32 to vector<2x128xf32>
    %221 = arith.addf %219, %220 : vector<2x128xf32>
    %222 = vector.extract_strided_slice %221 {offsets = [0, 0], sizes = [2, 32], strides = [1, 1]} : vector<2x128xf32> to vector<2x32xf32>
    %223 = vector.extract_strided_slice %221 {offsets = [0, 32], sizes = [2, 32], strides = [1, 1]} : vector<2x128xf32> to vector<2x32xf32>
    %224 = vector.extract_strided_slice %217 {offsets = [0, 64], sizes = [2, 32], strides = [1, 1]} : vector<2x128xf32> to vector<2x32xf32>
    %225 = vector.extract_strided_slice %221 {offsets = [0, 96], sizes = [2, 32], strides = [1, 1]} : vector<2x128xf32> to vector<2x32xf32>
    %226 = arith.mulf %223, %193 : vector<2x32xf32>
    %227 = arith.mulf %222, %224 : vector<2x32xf32>
    %228 = arith.addf %226, %227 : vector<2x32xf32>
    %229 = math.tanh %228 : vector<2x32xf32>
    %230 = arith.mulf %225, %229 : vector<2x32xf32>
    %231 = vector.extract_strided_slice %13 {offsets = [12, 0], sizes = [2, 128], strides = [1, 1]} : vector<16x128xf32> to vector<2x128xf32>
    %cst_54 = arith.constant dense<0.000000e+00> : vector<2x128xf32>
    %232 = tpu.matmul %212, %14, %cst_54 {dimension_numbers = #tpu.dot_dimension_numbers<[1], [0], [0], [1], [0, 0, 1, 1], [], []>} : vector<2x32xf32>, vector<32x128xf32>, vector<2x128xf32> -> vector<2x128xf32>
    %233 = arith.addf %231, %232 : vector<2x128xf32>
    %234 = math.tanh %233 : vector<2x128xf32>
    %cst_55 = arith.constant 5.000000e-01 : f32
    %235 = vector.broadcast %cst_55 : f32 to vector<2x128xf32>
    %236 = arith.mulf %235, %234 : vector<2x128xf32>
    %cst_56 = arith.constant 5.000000e-01 : f32
    %237 = vector.broadcast %cst_56 : f32 to vector<2x128xf32>
    %238 = arith.addf %236, %237 : vector<2x128xf32>
    %239 = vector.extract_strided_slice %238 {offsets = [0, 0], sizes = [2, 32], strides = [1, 1]} : vector<2x128xf32> to vector<2x32xf32>
    %240 = vector.extract_strided_slice %238 {offsets = [0, 32], sizes = [2, 32], strides = [1, 1]} : vector<2x128xf32> to vector<2x32xf32>
    %241 = vector.extract_strided_slice %234 {offsets = [0, 64], sizes = [2, 32], strides = [1, 1]} : vector<2x128xf32> to vector<2x32xf32>
    %242 = vector.extract_strided_slice %238 {offsets = [0, 96], sizes = [2, 32], strides = [1, 1]} : vector<2x128xf32> to vector<2x32xf32>
    %243 = arith.mulf %240, %210 : vector<2x32xf32>
    %244 = arith.mulf %239, %241 : vector<2x32xf32>
    %245 = arith.addf %243, %244 : vector<2x32xf32>
    %246 = math.tanh %245 : vector<2x32xf32>
    %247 = arith.mulf %242, %246 : vector<2x32xf32>
    %248 = tpu.concatenate %247, %230 in 1 : vector<2x32xf32>, vector<2x32xf32> -> vector<2x64xf32>
    %cst_57 = arith.constant dense<0.000000e+00> : vector<2x128xf32>
    %249 = tpu.matmul %248, %15, %cst_57 {dimension_numbers = #tpu.dot_dimension_numbers<[1], [0], [0], [1], [0, 0, 1, 1], [], []>} : vector<2x64xf32>, vector<64x128xf32>, vector<2x128xf32> -> vector<2x128xf32>
    %250 = vector.broadcast %16 : vector<1x128xf32> to vector<2x128xf32>
    %251 = arith.addf %249, %250 : vector<2x128xf32>
    %252 = math.tanh %251 : vector<2x128xf32>
    %cst_58 = arith.constant 5.000000e-01 : f32
    %253 = vector.broadcast %cst_58 : f32 to vector<2x128xf32>
    %254 = arith.mulf %253, %252 : vector<2x128xf32>
    %cst_59 = arith.constant 5.000000e-01 : f32
    %255 = vector.broadcast %cst_59 : f32 to vector<2x128xf32>
    %256 = arith.addf %254, %255 : vector<2x128xf32>
    %257 = vector.extract_strided_slice %256 {offsets = [0, 0], sizes = [2, 32], strides = [1, 1]} : vector<2x128xf32> to vector<2x32xf32>
    %258 = vector.extract_strided_slice %256 {offsets = [0, 32], sizes = [2, 32], strides = [1, 1]} : vector<2x128xf32> to vector<2x32xf32>
    %259 = vector.extract_strided_slice %252 {offsets = [0, 64], sizes = [2, 32], strides = [1, 1]} : vector<2x128xf32> to vector<2x32xf32>
    %260 = vector.extract_strided_slice %256 {offsets = [0, 96], sizes = [2, 32], strides = [1, 1]} : vector<2x128xf32> to vector<2x32xf32>
    %261 = arith.mulf %258, %228 : vector<2x32xf32>
    %262 = arith.mulf %257, %259 : vector<2x32xf32>
    %263 = arith.addf %261, %262 : vector<2x32xf32>
    %264 = math.tanh %263 : vector<2x32xf32>
    %265 = arith.mulf %260, %264 : vector<2x32xf32>
    %266 = vector.extract_strided_slice %13 {offsets = [14, 0], sizes = [2, 128], strides = [1, 1]} : vector<16x128xf32> to vector<2x128xf32>
    %cst_60 = arith.constant dense<0.000000e+00> : vector<2x128xf32>
    %267 = tpu.matmul %247, %14, %cst_60 {dimension_numbers = #tpu.dot_dimension_numbers<[1], [0], [0], [1], [0, 0, 1, 1], [], []>} : vector<2x32xf32>, vector<32x128xf32>, vector<2x128xf32> -> vector<2x128xf32>
    %268 = arith.addf %266, %267 : vector<2x128xf32>
    %269 = math.tanh %268 : vector<2x128xf32>
    %cst_61 = arith.constant 5.000000e-01 : f32
    %270 = vector.broadcast %cst_61 : f32 to vector<2x128xf32>
    %271 = arith.mulf %270, %269 : vector<2x128xf32>
    %cst_62 = arith.constant 5.000000e-01 : f32
    %272 = vector.broadcast %cst_62 : f32 to vector<2x128xf32>
    %273 = arith.addf %271, %272 : vector<2x128xf32>
    %274 = vector.extract_strided_slice %273 {offsets = [0, 0], sizes = [2, 32], strides = [1, 1]} : vector<2x128xf32> to vector<2x32xf32>
    %275 = vector.extract_strided_slice %273 {offsets = [0, 32], sizes = [2, 32], strides = [1, 1]} : vector<2x128xf32> to vector<2x32xf32>
    %276 = vector.extract_strided_slice %269 {offsets = [0, 64], sizes = [2, 32], strides = [1, 1]} : vector<2x128xf32> to vector<2x32xf32>
    %277 = vector.extract_strided_slice %273 {offsets = [0, 96], sizes = [2, 32], strides = [1, 1]} : vector<2x128xf32> to vector<2x32xf32>
    %278 = arith.mulf %275, %245 : vector<2x32xf32>
    %279 = arith.mulf %274, %276 : vector<2x32xf32>
    %280 = arith.addf %278, %279 : vector<2x32xf32>
    %281 = math.tanh %280 : vector<2x32xf32>
    %282 = arith.mulf %277, %281 : vector<2x32xf32>
    %283 = tpu.concatenate %282, %265 in 1 : vector<2x32xf32>, vector<2x32xf32> -> vector<2x64xf32>
    %cst_63 = arith.constant dense<0.000000e+00> : vector<2x128xf32>
    %284 = tpu.matmul %283, %15, %cst_63 {dimension_numbers = #tpu.dot_dimension_numbers<[1], [0], [0], [1], [0, 0, 1, 1], [], []>} : vector<2x64xf32>, vector<64x128xf32>, vector<2x128xf32> -> vector<2x128xf32>
    %285 = vector.broadcast %16 : vector<1x128xf32> to vector<2x128xf32>
    %286 = arith.addf %284, %285 : vector<2x128xf32>
    %287 = math.tanh %286 : vector<2x128xf32>
    %cst_64 = arith.constant 5.000000e-01 : f32
    %288 = vector.broadcast %cst_64 : f32 to vector<2x128xf32>
    %289 = arith.mulf %288, %287 : vector<2x128xf32>
    %cst_65 = arith.constant 5.000000e-01 : f32
    %290 = vector.broadcast %cst_65 : f32 to vector<2x128xf32>
    %291 = arith.addf %289, %290 : vector<2x128xf32>
    %292 = vector.extract_strided_slice %291 {offsets = [0, 0], sizes = [2, 32], strides = [1, 1]} : vector<2x128xf32> to vector<2x32xf32>
    %293 = vector.extract_strided_slice %291 {offsets = [0, 32], sizes = [2, 32], strides = [1, 1]} : vector<2x128xf32> to vector<2x32xf32>
    %294 = vector.extract_strided_slice %287 {offsets = [0, 64], sizes = [2, 32], strides = [1, 1]} : vector<2x128xf32> to vector<2x32xf32>
    %295 = vector.extract_strided_slice %291 {offsets = [0, 96], sizes = [2, 32], strides = [1, 1]} : vector<2x128xf32> to vector<2x32xf32>
    %296 = arith.mulf %293, %263 : vector<2x32xf32>
    %297 = arith.mulf %292, %294 : vector<2x32xf32>
    %298 = arith.addf %296, %297 : vector<2x32xf32>
    %299 = math.tanh %298 : vector<2x32xf32>
    %300 = arith.mulf %295, %299 : vector<2x32xf32>
    %c0_66 = arith.constant 0 : index
    %c0_67 = arith.constant 0 : index
    %301 = vector.load %arg7[%c0_66, %c0_67] : memref<1x32xf32, #tpu.memory_space<vmem>>, vector<1x32xf32>
    %cst_68 = arith.constant dense<0.000000e+00> : vector<1x2xf32>
    %302 = tpu.matmul %301, %300, %cst_68 {dimension_numbers = #tpu.dot_dimension_numbers<[1], [1], [0], [0], [0, 0, 1, 0], [], []>} : vector<1x32xf32>, vector<2x32xf32>, vector<1x2xf32> -> vector<1x2xf32>
    %c0_69 = arith.constant 0 : index
    %c0_70 = arith.constant 0 : index
    %303 = memref.load %arg8[%c0_69, %c0_70] : memref<1x1xf32, #tpu.memory_space<smem>>
    %304 = vector.broadcast %303 : f32 to vector<1x2xf32>
    %305 = arith.addf %302, %304 : vector<1x2xf32>
    %cst_71 = arith.constant 5.000000e-01 : f32
    %306 = vector.broadcast %cst_71 : f32 to vector<1x2xf32>
    %307 = arith.mulf %306, %305 : vector<1x2xf32>
    %308 = math.tanh %307 : vector<1x2xf32>
    %cst_72 = arith.constant 5.000000e-01 : f32
    %309 = vector.broadcast %cst_72 : f32 to vector<1x2xf32>
    %310 = arith.mulf %309, %308 : vector<1x2xf32>
    %cst_73 = arith.constant 5.000000e-01 : f32
    %311 = vector.broadcast %cst_73 : f32 to vector<1x2xf32>
    %312 = arith.addf %310, %311 : vector<1x2xf32>
    %c0_74 = arith.constant 0 : index
    %c0_75 = arith.constant 0 : index
    %313 = vector.load %arg9[%c0_74, %c0_75] : memref<1x2xf32, #tpu.memory_space<vmem>>, vector<1x2xf32>
    tpu.vector_store %arg9[%c0_74, %c0_75], %312 {strides = array<i32>} : memref<1x2xf32, #tpu.memory_space<vmem>>, vector<1x2xf32>,
    return
  }
}

</mosaic_0001>

<llo_original>
// kernel: lstm_forward.1
$region0: #{lstm_forward.1}
  #allocation0 [shape = 'u32[]', space=smem, size = 0x4, offset = 0x4, fixed_abs, tag = 'smem constant byte address 0x4 - core index']
  #allocation1 [shape = 'u32[144,128]{1,0:T(1,128)}', space=vmem, size = 0x12000, scoped, tag = 'internal scratch']
  #allocation2 [shape = 'f32[1,1]{1,0:T(1,128)S(6)}', space=smem, size = 0x200, scoped, tag = 'scoped memory for lstm_forward.1']
  %s0 = inlined_call_operand.vmem [shape: s32[16,1], index: 0, kind: input, shape index: {}]
  %s1 = inlined_call_operand.vmem [shape: f32[32,128], index: 1, kind: input, shape index: {}]
  %s2 = inlined_call_operand.hbm [shape: f32[128,128], index: 2, kind: input, shape index: {}]
  %s3 = inlined_call_operand.hbm [shape: f32[32,128], index: 3, kind: input, shape index: {}]
  %s4 = inlined_call_operand.vmem [shape: f32[1,128], index: 4, kind: input, shape index: {}]
  %s5 = inlined_call_operand.hbm [shape: f32[64,128], index: 5, kind: input, shape index: {}]
  %s6 = inlined_call_operand.vmem [shape: f32[1,128], index: 6, kind: input, shape index: {}]
  %s7 = inlined_call_operand.vmem [shape: f32[1,32], index: 7, kind: input, shape index: {}]
  %s8 = inlined_call_operand.<no memory space> [shape: f32[1,1], index: 8, kind: input, shape index: {}]
  %s9 = inlined_call_operand.hbm [shape: f32[1,2], index: 9, kind: output, shape index: {}]
  %s10 = sld [smem:[#allocation0]]
  $region58: #{lstm_forward.1} parent=0
    _
  %s12 = ssub.s32 1, %s10
  %s13 = scalar_select 0, %s12, %s10
  %14 = sst [smem:[#allocation2]] %s8
  $region1: #{lstm_forward.1} parent=0
    #allocation3 [shape = 'u8[65536]{0}', space=vmem, size = 0x10000, scoped, tag = 'input window, operand 2, single buffered']
    #allocation4 [shape = 's32[1]{0}', space=sflag, size = 0x4, scoped, tag = 'scoped memory for lstm_forward.1']
    #allocation5 [shape = 's32[1]{0}', space=sflag, size = 0x4, scoped, tag = 'scoped memory for lstm_forward.1']
    #allocation6 [shape = 'u8[16384]{0}', space=vmem, size = 0x4000, scoped, tag = 'input window, operand 3, single buffered']
    #allocation7 [shape = 's32[1]{0}', space=sflag, size = 0x4, scoped, tag = 'scoped memory for lstm_forward.1']
    #allocation8 [shape = 'u8[32768]{0}', space=vmem, size = 0x8000, scoped, tag = 'input window, operand 5, single buffered']
    #allocation9 [shape = 'u8[512]{0}', space=vmem, size = 0x400, scoped, tag = 'output window, operand 0, single buffered']
    %15 = vsyncpa [#allocation4], 0
    %16 = vsyncpa [#allocation7], 0
    %17 = vsyncpa [#allocation5], 0
    // Predicated region
    $region2: #{lstm_forward.1} parent=1 // pred_check
      _
    $region3: #{lstm_forward.1} parent=1 // pred_check_branch
      %19 = sbr.rel (0) target = $region5
    $region4: #{lstm_forward.1} parent=1 // pred_region
      _
    $region5: #{lstm_forward.1} parent=1 // pred_fallthru
      _
    // Predicated region
    $region6: #{lstm_forward.1} parent=1 // pred_check
      _
    $region7: #{lstm_forward.1} parent=1 // pred_check_branch
      %21 = sbr.rel (0) target = $region9
    $region8: #{lstm_forward.1} parent=1 // pred_region
      _
    $region9: #{lstm_forward.1} parent=1 // pred_fallthru
      _
    // Predicated region
    $region10: #{lstm_forward.1} parent=1 // pred_check
      _
    $region11: #{lstm_forward.1} parent=1 // pred_check_branch
      %23 = sbr.rel (0) target = $region13
    $region12: #{lstm_forward.1} parent=1 // pred_region
      %s25 = ssub.s32 2048, 2048
      %26 = vsyncadd [#allocation4], %s25
      %s27 = sshll.u32 [#allocation3], 4
      %s28 = int_to_ptr.vmem [resolvable:$true] %s27
      %33 = dma.hbm_to_vmem [thread:$0]  %s2, 2048, %s28, [#allocation4], 128, 128, 8
    $region13: #{lstm_forward.1} parent=1 // pred_fallthru
      _
    // Predicated region
    $region14: #{lstm_forward.1} parent=1 // pred_check
      _
    $region15: #{lstm_forward.1} parent=1 // pred_check_branch
      %35 = sbr.rel (0) target = $region17
    $region16: #{lstm_forward.1} parent=1 // pred_region
      %s37 = ssub.s32 512, 512
      %38 = vsyncadd [#allocation7], %s37
      %s39 = sshll.u32 [#allocation6], 4
      %s40 = int_to_ptr.vmem [resolvable:$true] %s39
      %45 = dma.hbm_to_vmem [thread:$0]  %s3, 512, %s40, [#allocation7], 128, 128, 8
    $region17: #{lstm_forward.1} parent=1 // pred_fallthru
      _
    // Predicated region
    $region18: #{lstm_forward.1} parent=1 // pred_check
      _
    $region19: #{lstm_forward.1} parent=1 // pred_check_branch
      %47 = sbr.rel (0) target = $region21
    $region20: #{lstm_forward.1} parent=1 // pred_region
      _
    $region21: #{lstm_forward.1} parent=1 // pred_fallthru
      _
    // Predicated region
    $region22: #{lstm_forward.1} parent=1 // pred_check
      _
    $region23: #{lstm_forward.1} parent=1 // pred_check_branch
      %49 = sbr.rel (0) target = $region25
    $region24: #{lstm_forward.1} parent=1 // pred_region
      %s51 = ssub.s32 1024, 1024
      %52 = vsyncadd [#allocation7], %s51
      %s53 = sshll.u32 [#allocation8], 4
      %s54 = int_to_ptr.vmem [resolvable:$true] %s53
      %59 = dma.hbm_to_vmem [thread:$0]  %s5, 1024, %s54, [#allocation7], 128, 128, 8
    $region25: #{lstm_forward.1} parent=1 // pred_fallthru
      _
    // Predicated region
    $region26: #{lstm_forward.1} parent=1 // pred_check
      _
    $region27: #{lstm_forward.1} parent=1 // pred_check_branch
      %61 = sbr.rel (0) target = $region29
    $region28: #{lstm_forward.1} parent=1 // pred_region
      _
    $region29: #{lstm_forward.1} parent=1 // pred_fallthru
      _
    // Predicated region
    $region30: #{lstm_forward.1} parent=1 // pred_check
      _
    $region31: #{lstm_forward.1} parent=1 // pred_check_branch
      %63 = sbr.rel (0) target = $region33
    $region32: #{lstm_forward.1} parent=1 // pred_region
      _
    $region33: #{lstm_forward.1} parent=1 // pred_fallthru
      _
    // Predicated region
    $region34: #{lstm_forward.1} parent=1 // pred_check
      _
    $region35: #{lstm_forward.1} parent=1 // pred_check_branch
      %65 = sbr.rel (0) target = $region37
    $region36: #{lstm_forward.1} parent=1 // pred_region
      _
    $region37: #{lstm_forward.1} parent=1 // pred_fallthru
      _
    // Predicated region
    $region38: #{lstm_forward.1} parent=1 // pred_check
      _
    $region39: #{lstm_forward.1} parent=1 // pred_check_branch
      %67 = sbr.rel (0) target = $region41
    $region40: #{lstm_forward.1} parent=1 // pred_region
      %68 = dma.done [#allocation4], 2048
    $region41: #{lstm_forward.1} parent=1 // pred_fallthru
      _
    // Predicated region
    $region42: #{lstm_forward.1} parent=1 // pred_check
      _
    $region43: #{lstm_forward.1} parent=1 // pred_check_branch
      %70 = sbr.rel (0) target = $region45
    $region44: #{lstm_forward.1} parent=1 // pred_region
      %71 = dma.done [#allocation7], 512
    $region45: #{lstm_forward.1} parent=1 // pred_fallthru
      _
    // Predicated region
    $region46: #{lstm_forward.1} parent=1 // pred_check
      _
    $region47: #{lstm_forward.1} parent=1 // pred_check_branch
      %73 = sbr.rel (0) target = $region49
    $region48: #{lstm_forward.1} parent=1 // pred_region
      %74 = dma.done [#allocation7], 1024
    $region49: #{lstm_forward.1} parent=1 // pred_fallthru
      _
    %v75 = vlaneseq
    %v76 = vand.u32 %v75, 127
    %v77 = vld [vmem:[%s0] sm:$0xff]
    %v78 = vld [vmem:[%s0 + $0x8] sm:$0xff]
    %79 = vset.pattern.permute.xlu0 0
    %80 = vperm.xlu0 %79, %v77
    %v81 = vpop.permute.xlu0 %80
    %82 = vset.pattern.permute.xlu0 0
    %83 = vperm.xlu0 %82, %v78
    %v84 = vpop.permute.xlu0 %83
    %vm85 = vcmp.eq.s32.totalorder %v81, %v76
    %vm86 = vcmp.eq.s32.totalorder %v84, %v76
    %v87 = vsel %vm85, 1, 0
    %v88 = vsel %vm86, 1, 0
    %v89 = vcvt.s32.f32 %v87
    %v90 = vcvt.s32.f32 %v88
    %v91 = vld [vmem:[%s1] sm:$0xff]
    %v92 = vld [vmem:[%s1 + $0x8] sm:$0xff]
    %v93 = vld [vmem:[%s1 + $0x10] sm:$0xff]
    %v94 = vld [vmem:[%s1 + $0x18] sm:$0xff]
    %vm95 = vcmask 261120
    %v97 = vsel %vm95, %v89, 0
    %v100 = vsel %vm95, %v90, 0
    %102 = vmatprep.subr.mxu0 0.0
    %103 = vmatpush1.msra.mxu0 %v91
    %104 = vmatprep.subr.mxu0 0.0
    %105 = vmatpush1.msra.mxu0 %v92
    %106 = vmatprep.subr.mxu0 0.0
    %107 = vmatpush1.msra.mxu0 %v93
    %108 = vmatprep.subr.mxu0 0.0
    %109 = vmatpush1.msra.mxu0 %v94
    %110 = vmatprep.subr.mxu0 0.0
    %111 = vmatpush1.msra.mxu0 0.0
    %112 = vmatprep.subr.mxu0 0.0
    %113 = vmatpush1.msra.mxu0 0.0
    %114 = vmatprep.subr.mxu0 0.0
    %115 = vmatpush1.msra.mxu0 0.0
    %116 = vmatprep.subr.mxu0 0.0
    %117 = vmatpush1.msra.mxu0 0.0
    %118 = vmatprep.subr.mxu0 0.0
    %119 = vmatpush1.msra.mxu0 0.0
    %120 = vmatprep.subr.mxu0 0.0
    %121 = vmatpush1.msra.mxu0 0.0
    %122 = vmatprep.subr.mxu0 0.0
    %123 = vmatpush1.msra.mxu0 0.0
    %124 = vmatprep.subr.mxu0 0.0
    %125 = vmatpush1.msra.mxu0 0.0
    %126 = vmatprep.subr.mxu0 0.0
    %127 = vmatpush1.msra.mxu0 0.0
    %128 = vmatprep.subr.mxu0 0.0
    %129 = vmatpush1.msra.mxu0 0.0
    %130 = vmatprep.subr.mxu0 0.0
    %131 = vmatpush1.msra.mxu0 0.0
    %132 = vmatprep.subr.mxu0 0.0
    %133 = vmatpush1.msra.mxu0 0.0
    %134 = vmatprep.subr.mxu0 0.0
    %135 = vmatpush1.msra.mxu0 0.0
    %136 = vmatprep.subr.mxu0 0.0
    %137 = vmatpush1.msra.mxu0 0.0
    %138 = vmatprep.subr.mxu0 0.0
    %139 = vmatpush1.msra.mxu0 0.0
    %140 = vmatprep.subr.mxu0 0.0
    %141 = vmatpush1.msra.mxu0 0.0
    %142 = vmatprep.subr.mxu0 0.0
    %143 = vmatpush1.msra.mxu0 0.0
    %144 = vmatprep.subr.mxu0 0.0
    %145 = vmatpush1.msra.mxu0 0.0
    %146 = vmatprep.subr.mxu0 0.0
    %147 = vmatpush1.msra.mxu0 0.0
    %148 = vmatprep.subr.mxu0 0.0
    %149 = vmatpush1.msra.mxu0 0.0
    %150 = vmatprep.subr.mxu0 0.0
    %151 = vmatpush1.msra.mxu0 0.0
    %152 = vmatprep.subr.mxu0 0.0
    %153 = vmatpush1.msra.mxu0 0.0
    %154 = vmatprep.subr.mxu0 0.0
    %155 = vmatpush1.msra.mxu0 0.0
    %156 = vmatprep.subr.mxu0 0.0
    %157 = vmatpush1.msra.mxu0 0.0
    %158 = vmatprep.subr.mxu0 0.0
    %159 = vmatpush1.msra.mxu0 0.0
    %160 = vmatprep.subr.mxu0 0.0
    %161 = vmatpush1.msra.mxu0 0.0
    %162 = vmatprep.subr.mxu0 0.0
    %163 = vmatpush1.msra.mxu0 0.0
    %164 = vmatprep.subr.mxu0 0.0
    %165 = vmatpush1.msra.mxu0 0.0
    %166 = vmatprep.mubr.f32.mxu0 0.0
    %167 = vmatmul.mubr.f32.gmra.mrb[0].mxu0 %v97
    %v168 = vpop.f32.mrb[0].mxu0
    %v169 = vadd.f32 0.0, %v168
    %v170 = vpop.f32.mrb[0].mxu0
    %171 = vmatprep.mubr.f32.mxu0 0.0
    %172 = vmatmul.mubr.f32.gmra.mrb[0].mxu0 %v100
    %v173 = vpop.f32.mrb[0].mxu0
    %v174 = vadd.f32 0.0, %v173
    %v175 = vpop.f32.mrb[0].mxu0
    %176 = vdwg.mxu0
    %v177 = vld [vmem:[#allocation3] sm:$0xff]
    %v178 = vld [vmem:[#allocation3 + $0x8] sm:$0xff]
    %v179 = vld [vmem:[#allocation3 + $0x10] sm:$0xff]
    %v180 = vld [vmem:[#allocation3 + $0x18] sm:$0xff]
    %v181 = vld [vmem:[#allocation3 + $0x20] sm:$0xff]
    %v182 = vld [vmem:[#allocation3 + $0x28] sm:$0xff]
    %v183 = vld [vmem:[#allocation3 + $0x30] sm:$0xff]
    %v184 = vld [vmem:[#allocation3 + $0x38] sm:$0xff]
    %v185 = vld [vmem:[#allocation3 + $0x40] sm:$0xff]
    %v186 = vld [vmem:[#allocation3 + $0x48] sm:$0xff]
    %v187 = vld [vmem:[#allocation3 + $0x50] sm:$0xff]
    %v188 = vld [vmem:[#allocation3 + $0x58] sm:$0xff]
    %v189 = vld [vmem:[#allocation3 + $0x60] sm:$0xff]
    %v190 = vld [vmem:[#allocation3 + $0x68] sm:$0xff]
    %v191 = vld [vmem:[#allocation3 + $0x70] sm:$0xff]
    %v192 = vld [vmem:[#allocation3 + $0x78] sm:$0xff]
    %v193 = vld [vmem:[%s4] sm:$0x1]
    %v195 = vlaneseq
    %v196 = vshrl.u32 %v195, 7
    %v197 = vsub.s32 0, %v196
    %v198 = vrot.slane %v193, %v197
    %200 = vmatprep.subr.mxu0 0.0
    %201 = vmatpush1.msra.mxu0 %v177
    %202 = vmatprep.subr.mxu0 0.0
    %203 = vmatpush1.msra.mxu0 %v178
    %204 = vmatprep.subr.mxu0 0.0
    %205 = vmatpush1.msra.mxu0 %v179
    %206 = vmatprep.subr.mxu0 0.0
    %207 = vmatpush1.msra.mxu0 %v180
    %208 = vmatprep.subr.mxu0 0.0
    %209 = vmatpush1.msra.mxu0 %v181
    %210 = vmatprep.subr.mxu0 0.0
    %211 = vmatpush1.msra.mxu0 %v182
    %212 = vmatprep.subr.mxu0 0.0
    %213 = vmatpush1.msra.mxu0 %v183
    %214 = vmatprep.subr.mxu0 0.0
    %215 = vmatpush1.msra.mxu0 %v184
    %216 = vmatprep.subr.mxu0 0.0
    %217 = vmatpush1.msra.mxu0 %v185
    %218 = vmatprep.subr.mxu0 0.0
    %219 = vmatpush1.msra.mxu0 %v186
    %220 = vmatprep.subr.mxu0 0.0
    %221 = vmatpush1.msra.mxu0 %v187
    %222 = vmatprep.subr.mxu0 0.0
    %223 = vmatpush1.msra.mxu0 %v188
    %224 = vmatprep.subr.mxu0 0.0
    %225 = vmatpush1.msra.mxu0 %v189
    %226 = vmatprep.subr.mxu0 0.0
    %227 = vmatpush1.msra.mxu0 %v190
    %228 = vmatprep.subr.mxu0 0.0
    %229 = vmatpush1.msra.mxu0 %v191
    %230 = vmatprep.subr.mxu0 0.0
    %231 = vmatpush1.msra.mxu0 %v192
    %232 = vmatprep.subr.mxu0 0.0
    %233 = vmatpush1.msra.mxu0 0.0
    %234 = vmatprep.subr.mxu0 0.0
    %235 = vmatpush1.msra.mxu0 0.0
    %236 = vmatprep.subr.mxu0 0.0
    %237 = vmatpush1.msra.mxu0 0.0
    %238 = vmatprep.subr.mxu0 0.0
    %239 = vmatpush1.msra.mxu0 0.0
    %240 = vmatprep.subr.mxu0 0.0
    %241 = vmatpush1.msra.mxu0 0.0
    %242 = vmatprep.subr.mxu0 0.0
    %243 = vmatpush1.msra.mxu0 0.0
    %244 = vmatprep.subr.mxu0 0.0
    %245 = vmatpush1.msra.mxu0 0.0
    %246 = vmatprep.subr.mxu0 0.0
    %247 = vmatpush1.msra.mxu0 0.0
    %248 = vmatprep.subr.mxu0 0.0
    %249 = vmatpush1.msra.mxu0 0.0
    %250 = vmatprep.subr.mxu0 0.0
    %251 = vmatpush1.msra.mxu0 0.0
    %252 = vmatprep.subr.mxu0 0.0
    %253 = vmatpush1.msra.mxu0 0.0
    %254 = vmatprep.subr.mxu0 0.0
    %255 = vmatpush1.msra.mxu0 0.0
    %256 = vmatprep.subr.mxu0 0.0
    %257 = vmatpush1.msra.mxu0 0.0
    %258 = vmatprep.subr.mxu0 0.0
    %259 = vmatpush1.msra.mxu0 0.0
    %260 = vmatprep.subr.mxu0 0.0
    %261 = vmatpush1.msra.mxu0 0.0
    %262 = vmatprep.subr.mxu0 0.0
    %263 = vmatpush1.msra.mxu0 0.0
    %264 = vmatprep.mubr.f32.mxu0 0.0
    %265 = vmatmul.mubr.f32.gmra.mrb[0].mxu0 %v169
    %v266 = vpop.f32.mrb[0].mxu0
    %v267 = vadd.f32 %v198, %v266
    %v268 = vpop.f32.mrb[0].mxu0
    %269 = vmatprep.mubr.f32.mxu0 0.0
    %270 = vmatmul.mubr.f32.gmra.mrb[0].mxu0 %v174
    %v271 = vpop.f32.mrb[0].mxu0
    %v272 = vadd.f32 %v198, %v271
    %v273 = vpop.f32.mrb[0].mxu0
    %274 = vdwg.mxu0
    %v275 = vld [vmem:[#allocation6] sm:$0xff]
    %v276 = vld [vmem:[#allocation6 + $0x8] sm:$0xff]
    %v277 = vld [vmem:[#allocation6 + $0x10] sm:$0xff]
    %v278 = vld [vmem:[#allocation6 + $0x18] sm:$0xff]
    %v279 = vld [vmem:[#allocation8] sm:$0xff]
    %v280 = vld [vmem:[#allocation8 + $0x8] sm:$0xff]
    %v281 = vld [vmem:[#allocation8 + $0x10] sm:$0xff]
    %v282 = vld [vmem:[#allocation8 + $0x18] sm:$0xff]
    %v283 = vld [vmem:[#allocation8 + $0x20] sm:$0xff]
    %v284 = vld [vmem:[#allocation8 + $0x28] sm:$0xff]
    %v285 = vld [vmem:[#allocation8 + $0x30] sm:$0xff]
    %v286 = vld [vmem:[#allocation8 + $0x38] sm:$0xff]
    %v287 = vld [vmem:[%s6] sm:$0x1]
    %v289 = vsel %vm95, 0.0, 0
    %291 = vmatprep.subr.mxu0 0.0
    %292 = vmatpush1.msra.mxu0 %v275
    %293 = vmatprep.subr.mxu0 0.0
    %294 = vmatpush1.msra.mxu0 %v276
    %295 = vmatprep.subr.mxu0 0.0
    %296 = vmatpush1.msra.mxu0 %v277
    %297 = vmatprep.subr.mxu0 0.0
    %298 = vmatpush1.msra.mxu0 %v278
    %299 = vmatprep.subr.mxu0 0.0
    %300 = vmatpush1.msra.mxu0 0.0
    %301 = vmatprep.subr.mxu0 0.0
    %302 = vmatpush1.msra.mxu0 0.0
    %303 = vmatprep.subr.mxu0 0.0
    %304 = vmatpush1.msra.mxu0 0.0
    %305 = vmatprep.subr.mxu0 0.0
    %306 = vmatpush1.msra.mxu0 0.0
    %307 = vmatprep.subr.mxu0 0.0
    %308 = vmatpush1.msra.mxu0 0.0
    %309 = vmatprep.subr.mxu0 0.0
    %310 = vmatpush1.msra.mxu0 0.0
    %311 = vmatprep.subr.mxu0 0.0
    %312 = vmatpush1.msra.mxu0 0.0
    %313 = vmatprep.subr.mxu0 0.0
    %314 = vmatpush1.msra.mxu0 0.0
    %315 = vmatprep.subr.mxu0 0.0
    %316 = vmatpush1.msra.mxu0 0.0
    %317 = vmatprep.subr.mxu0 0.0
    %318 = vmatpush1.msra.mxu0 0.0
    %319 = vmatprep.subr.mxu0 0.0
    %320 = vmatpush1.msra.mxu0 0.0
    %321 = vmatprep.subr.mxu0 0.0
    %322 = vmatpush1.msra.mxu0 0.0
    %323 = vmatprep.subr.mxu0 0.0
    %324 = vmatpush1.msra.mxu0 0.0
    %325 = vmatprep.subr.mxu0 0.0
    %326 = vmatpush1.msra.mxu0 0.0
    %327 = vmatprep.subr.mxu0 0.0
    %328 = vmatpush1.msra.mxu0 0.0
    %329 = vmatprep.subr.mxu0 0.0
    %330 = vmatpush1.msra.mxu0 0.0
    %331 = vmatprep.subr.mxu0 0.0
    %332 = vmatpush1.msra.mxu0 0.0
    %333 = vmatprep.subr.mxu0 0.0
    %334 = vmatpush1.msra.mxu0 0.0
    %335 = vmatprep.subr.mxu0 0.0
    %336 = vmatpush1.msra.mxu0 0.0
    %337 = vmatprep.subr.mxu0 0.0
    %338 = vmatpush1.msra.mxu0 0.0
    %339 = vmatprep.subr.mxu0 0.0
    %340 = vmatpush1.msra.mxu0 0.0
    %341 = vmatprep.subr.mxu0 0.0
    %342 = vmatpush1.msra.mxu0 0.0
    %343 = vmatprep.subr.mxu0 0.0
    %344 = vmatpush1.msra.mxu0 0.0
    %345 = vmatprep.subr.mxu0 0.0
    %346 = vmatpush1.msra.mxu0 0.0
    %347 = vmatprep.subr.mxu0 0.0
    %348 = vmatpush1.msra.mxu0 0.0
    %349 = vmatprep.subr.mxu0 0.0
    %350 = vmatpush1.msra.mxu0 0.0
    %351 = vmatprep.subr.mxu0 0.0
    %352 = vmatpush1.msra.mxu0 0.0
    %353 = vmatprep.subr.mxu0 0.0
    %354 = vmatpush1.msra.mxu0 0.0
    %355 = vmatprep.mubr.f32.mxu0 0.0
    %356 = vmatmul.mubr.f32.gmra.mrb[0].mxu0 %v289
    %v357 = vpop.f32.mrb[0].mxu0
    %v358 = vadd.f32 0.0, %v357
    %v359 = vpop.f32.mrb[0].mxu0
    %360 = vdwg.mxu0
    %v361 = vadd.f32 %v267, %v358
    %v362 = vtanh.pop %v361
    %v363 = vmul.f32 %v362, 0.5
    %v364 = vadd.f32 %v363, 0.5
    %v365 = vmul.f32 %v364, 0.0
    %367 = vrot.lane.b32.xlu0 %v362, 64
    %v368 = vpop.permute.xlu0 %367
    %v370 = vmul.f32 %v364, %v368
    %372 = vrot.lane.b32.xlu0 %v370, 32
    %v373 = vpop.permute.xlu0 %372
    %v375 = vadd.f32 %v365, %v373
    %v376 = vtanh.pop %v375
    %378 = vrot.lane.b32.xlu0 %v376, 64
    %v379 = vpop.permute.xlu0 %378
    %v381 = vmul.f32 %v364, %v379
    %383 = vrot.lane.b32.xlu0 %v381, 32
    %v384 = vpop.permute.xlu0 %383
    %v386 = vsel %vm95, %v384, 0.0
    %v388 = vlaneseq
    %v389 = vshrl.u32 %v388, 7
    %v390 = vsub.s32 0, %v389
    %v391 = vrot.slane %v287, %v390
    %vm393 = vcmask 523264
    %v395 = vsel %vm393, %v386, 0
    %397 = vmatprep.subr.mxu0 0.0
    %398 = vmatpush1.msra.mxu0 %v279
    %399 = vmatprep.subr.mxu0 0.0
    %400 = vmatpush1.msra.mxu0 %v280
    %401 = vmatprep.subr.mxu0 0.0
    %402 = vmatpush1.msra.mxu0 %v281
    %403 = vmatprep.subr.mxu0 0.0
    %404 = vmatpush1.msra.mxu0 %v282
    %405 = vmatprep.subr.mxu0 0.0
    %406 = vmatpush1.msra.mxu0 %v283
    %407 = vmatprep.subr.mxu0 0.0
    %408 = vmatpush1.msra.mxu0 %v284
    %409 = vmatprep.subr.mxu0 0.0
    %410 = vmatpush1.msra.mxu0 %v285
    %411 = vmatprep.subr.mxu0 0.0
    %412 = vmatpush1.msra.mxu0 %v286
    %413 = vmatprep.subr.mxu0 0.0
    %414 = vmatpush1.msra.mxu0 0.0
    %415 = vmatprep.subr.mxu0 0.0
    %416 = vmatpush1.msra.mxu0 0.0
    %417 = vmatprep.subr.mxu0 0.0
    %418 = vmatpush1.msra.mxu0 0.0
    %419 = vmatprep.subr.mxu0 0.0
    %420 = vmatpush1.msra.mxu0 0.0
    %421 = vmatprep.subr.mxu0 0.0
    %422 = vmatpush1.msra.mxu0 0.0
    %423 = vmatprep.subr.mxu0 0.0
    %424 = vmatpush1.msra.mxu0 0.0
    %425 = vmatprep.subr.mxu0 0.0
    %426 = vmatpush1.msra.mxu0 0.0
    %427 = vmatprep.subr.mxu0 0.0
    %428 = vmatpush1.msra.mxu0 0.0
    %429 = vmatprep.subr.mxu0 0.0
    %430 = vmatpush1.msra.mxu0 0.0
    %431 = vmatprep.subr.mxu0 0.0
    %432 = vmatpush1.msra.mxu0 0.0
    %433 = vmatprep.subr.mxu0 0.0
    %434 = vmatpush1.msra.mxu0 0.0
    %435 = vmatprep.subr.mxu0 0.0
    %436 = vmatpush1.msra.mxu0 0.0
    %437 = vmatprep.subr.mxu0 0.0
    %438 = vmatpush1.msra.mxu0 0.0
    %439 = vmatprep.subr.mxu0 0.0
    %440 = vmatpush1.msra.mxu0 0.0
    %441 = vmatprep.subr.mxu0 0.0
    %442 = vmatpush1.msra.mxu0 0.0
    %443 = vmatprep.subr.mxu0 0.0
    %444 = vmatpush1.msra.mxu0 0.0
    %445 = vmatprep.subr.mxu0 0.0
    %446 = vmatpush1.msra.mxu0 0.0
    %447 = vmatprep.subr.mxu0 0.0
    %448 = vmatpush1.msra.mxu0 0.0
    %449 = vmatprep.subr.mxu0 0.0
    %450 = vmatpush1.msra.mxu0 0.0
    %451 = vmatprep.subr.mxu0 0.0
    %452 = vmatpush1.msra.mxu0 0.0
    %453 = vmatprep.subr.mxu0 0.0
    %454 = vmatpush1.msra.mxu0 0.0
    %455 = vmatprep.subr.mxu0 0.0
    %456 = vmatpush1.msra.mxu0 0.0
    %457 = vmatprep.subr.mxu0 0.0
    %458 = vmatpush1.msra.mxu0 0.0
    %459 = vmatprep.subr.mxu0 0.0
    %460 = vmatpush1.msra.mxu0 0.0
    %461 = vmatprep.mubr.f32.mxu0 0.0
    %462 = vmatmul.mubr.f32.gmra.mrb[0].mxu0 %v395
    %v463 = vpop.f32.mrb[0].mxu0
    %v464 = vadd.f32 %v391, %v463
    %v465 = vpop.f32.mrb[0].mxu0
    %466 = vdwg.mxu0
    %v467 = vtanh.pop %v464
    %v468 = vmul.f32 %v467, 0.5
    %v469 = vadd.f32 %v468, 0.5
    %v470 = vmul.f32 %v469, 0.0
    %472 = vrot.lane.b32.xlu0 %v467, 64
    %v473 = vpop.permute.xlu0 %472
    %v475 = vmul.f32 %v469, %v473
    %477 = vrot.lane.b32.xlu0 %v475, 32
    %v478 = vpop.permute.xlu0 %477
    %v480 = vadd.f32 %v470, %v478
    %v481 = vtanh.pop %v480
    %483 = vrot.lane.b32.xlu0 %v481, 64
    %v484 = vpop.permute.xlu0 %483
    %v486 = vmul.f32 %v469, %v484
    %v487 = vsel %vm95, %v384, 0
    %489 = vmatprep.subr.mxu0 0.0
    %490 = vmatpush1.msra.mxu0 %v275
    %491 = vmatprep.subr.mxu0 0.0
    %492 = vmatpush1.msra.mxu0 %v276
    %493 = vmatprep.subr.mxu0 0.0
    %494 = vmatpush1.msra.mxu0 %v277
    %495 = vmatprep.subr.mxu0 0.0
    %496 = vmatpush1.msra.mxu0 %v278
    %497 = vmatprep.subr.mxu0 0.0
    %498 = vmatpush1.msra.mxu0 0.0
    %499 = vmatprep.subr.mxu0 0.0
    %500 = vmatpush1.msra.mxu0 0.0
    %501 = vmatprep.subr.mxu0 0.0
    %502 = vmatpush1.msra.mxu0 0.0
    %503 = vmatprep.subr.mxu0 0.0
    %504 = vmatpush1.msra.mxu0 0.0
    %505 = vmatprep.subr.mxu0 0.0
    %506 = vmatpush1.msra.mxu0 0.0
    %507 = vmatprep.subr.mxu0 0.0
    %508 = vmatpush1.msra.mxu0 0.0
    %509 = vmatprep.subr.mxu0 0.0
    %510 = vmatpush1.msra.mxu0 0.0
    %511 = vmatprep.subr.mxu0 0.0
    %512 = vmatpush1.msra.mxu0 0.0
    %513 = vmatprep.subr.mxu0 0.0
    %514 = vmatpush1.msra.mxu0 0.0
    %515 = vmatprep.subr.mxu0 0.0
    %516 = vmatpush1.msra.mxu0 0.0
    %517 = vmatprep.subr.mxu0 0.0
    %518 = vmatpush1.msra.mxu0 0.0
    %519 = vmatprep.subr.mxu0 0.0
    %520 = vmatpush1.msra.mxu0 0.0
    %521 = vmatprep.subr.mxu0 0.0
    %522 = vmatpush1.msra.mxu0 0.0
    %523 = vmatprep.subr.mxu0 0.0
    %524 = vmatpush1.msra.mxu0 0.0
    %525 = vmatprep.subr.mxu0 0.0
    %526 = vmatpush1.msra.mxu0 0.0
    %527 = vmatprep.subr.mxu0 0.0
    %528 = vmatpush1.msra.mxu0 0.0
    %529 = vmatprep.subr.mxu0 0.0
    %530 = vmatpush1.msra.mxu0 0.0
    %531 = vmatprep.subr.mxu0 0.0
    %532 = vmatpush1.msra.mxu0 0.0
    %533 = vmatprep.subr.mxu0 0.0
    %534 = vmatpush1.msra.mxu0 0.0
    %535 = vmatprep.subr.mxu0 0.0
    %536 = vmatpush1.msra.mxu0 0.0
    %537 = vmatprep.subr.mxu0 0.0
    %538 = vmatpush1.msra.mxu0 0.0
    %539 = vmatprep.subr.mxu0 0.0
    %540 = vmatpush1.msra.mxu0 0.0
    %541 = vmatprep.subr.mxu0 0.0
    %542 = vmatpush1.msra.mxu0 0.0
    %543 = vmatprep.subr.mxu0 0.0
    %544 = vmatpush1.msra.mxu0 0.0
    %545 = vmatprep.subr.mxu0 0.0
    %546 = vmatpush1.msra.mxu0 0.0
    %547 = vmatprep.subr.mxu0 0.0
    %548 = vmatpush1.msra.mxu0 0.0
    %549 = vmatprep.subr.mxu0 0.0
    %550 = vmatpush1.msra.mxu0 0.0
    %551 = vmatprep.subr.mxu0 0.0
    %552 = vmatpush1.msra.mxu0 0.0
    %553 = vmatprep.mubr.f32.mxu0 0.0
    %554 = vmatmul.mubr.f32.gmra.mrb[0].mxu0 %v487
    %v555 = vpop.f32.mrb[0].mxu0
    %v556 = vadd.f32 0.0, %v555
    %v557 = vpop.f32.mrb[0].mxu0
    %558 = vdwg.mxu0
    %v560 = vrot.slane %v556, 6
    %v562 = vadd.f32 %v267, %v560
    %v563 = vtanh.pop %v562
    %v564 = vmul.f32 %v563, 0.5
    %v565 = vadd.f32 %v564, 0.5
    %v567 = vrot.slane %v375, 6
    %v569 = vmul.f32 %v565, %v567
    %571 = vrot.lane.b32.xlu0 %v563, 64
    %v572 = vpop.permute.xlu0 %571
    %v574 = vmul.f32 %v565, %v572
    %576 = vrot.lane.b32.xlu0 %v574, 32
    %v577 = vpop.permute.xlu0 %576
    %v579 = vadd.f32 %v569, %v577
    %v580 = vtanh.pop %v579
    %582 = vrot.lane.b32.xlu0 %v580, 64
    %v583 = vpop.permute.xlu0 %582
    %v585 = vmul.f32 %v565, %v583
    %587 = vrot.lane.b32.xlu0 %v585, 32
    %v588 = vpop.permute.xlu0 %587
    %v591 = vrot.slane %v486, 6
    %592 = vrot.lane.b32.xlu0 %v591, 64
    %v593 = vpop.permute.xlu0 %592
    %v595 = vsel %vm95, %v588, %v593
    %v597 = vrot.slane %v595, 2
    %v598 = vsel %vm393, %v597, 0
    %600 = vmatprep.subr.mxu0 0.0
    %601 = vmatpush1.msra.mxu0 %v279
    %602 = vmatprep.subr.mxu0 0.0
    %603 = vmatpush1.msra.mxu0 %v280
    %604 = vmatprep.subr.mxu0 0.0
    %605 = vmatpush1.msra.mxu0 %v281
    %606 = vmatprep.subr.mxu0 0.0
    %607 = vmatpush1.msra.mxu0 %v282
    %608 = vmatprep.subr.mxu0 0.0
    %609 = vmatpush1.msra.mxu0 %v283
    %610 = vmatprep.subr.mxu0 0.0
    %611 = vmatpush1.msra.mxu0 %v284
    %612 = vmatprep.subr.mxu0 0.0
    %613 = vmatpush1.msra.mxu0 %v285
    %614 = vmatprep.subr.mxu0 0.0
    %615 = vmatpush1.msra.mxu0 %v286
    %616 = vmatprep.subr.mxu0 0.0
    %617 = vmatpush1.msra.mxu0 0.0
    %618 = vmatprep.subr.mxu0 0.0
    %619 = vmatpush1.msra.mxu0 0.0
    %620 = vmatprep.subr.mxu0 0.0
    %621 = vmatpush1.msra.mxu0 0.0
    %622 = vmatprep.subr.mxu0 0.0
    %623 = vmatpush1.msra.mxu0 0.0
    %624 = vmatprep.subr.mxu0 0.0
    %625 = vmatpush1.msra.mxu0 0.0
    %626 = vmatprep.subr.mxu0 0.0
    %627 = vmatpush1.msra.mxu0 0.0
    %628 = vmatprep.subr.mxu0 0.0
    %629 = vmatpush1.msra.mxu0 0.0
    %630 = vmatprep.subr.mxu0 0.0
    %631 = vmatpush1.msra.mxu0 0.0
    %632 = vmatprep.subr.mxu0 0.0
    %633 = vmatpush1.msra.mxu0 0.0
    %634 = vmatprep.subr.mxu0 0.0
    %635 = vmatpush1.msra.mxu0 0.0
    %636 = vmatprep.subr.mxu0 0.0
    %637 = vmatpush1.msra.mxu0 0.0
    %638 = vmatprep.subr.mxu0 0.0
    %639 = vmatpush1.msra.mxu0 0.0
    %640 = vmatprep.subr.mxu0 0.0
    %641 = vmatpush1.msra.mxu0 0.0
    %642 = vmatprep.subr.mxu0 0.0
    %643 = vmatpush1.msra.mxu0 0.0
    %644 = vmatprep.subr.mxu0 0.0
    %645 = vmatpush1.msra.mxu0 0.0
    %646 = vmatprep.subr.mxu0 0.0
    %647 = vmatpush1.msra.mxu0 0.0
    %648 = vmatprep.subr.mxu0 0.0
    %649 = vmatpush1.msra.mxu0 0.0
    %650 = vmatprep.subr.mxu0 0.0
    %651 = vmatpush1.msra.mxu0 0.0
    %652 = vmatprep.subr.mxu0 0.0
    %653 = vmatpush1.msra.mxu0 0.0
    %654 = vmatprep.subr.mxu0 0.0
    %655 = vmatpush1.msra.mxu0 0.0
    %656 = vmatprep.subr.mxu0 0.0
    %657 = vmatpush1.msra.mxu0 0.0
    %658 = vmatprep.subr.mxu0 0.0
    %659 = vmatpush1.msra.mxu0 0.0
    %660 = vmatprep.subr.mxu0 0.0
    %661 = vmatpush1.msra.mxu0 0.0
    %662 = vmatprep.subr.mxu0 0.0
    %663 = vmatpush1.msra.mxu0 0.0
    %664 = vmatprep.mubr.f32.mxu0 0.0
    %665 = vmatmul.mubr.f32.gmra.mrb[0].mxu0 %v598
    %v666 = vpop.f32.mrb[0].mxu0
    %v667 = vadd.f32 %v391, %v666
    %v668 = vpop.f32.mrb[0].mxu0
    %669 = vdwg.mxu0
    %v670 = vtanh.pop %v667
    %v671 = vmul.f32 %v670, 0.5
    %v672 = vadd.f32 %v671, 0.5
    %v673 = vmul.f32 %v672, %v480
    %675 = vrot.lane.b32.xlu0 %v670, 64
    %v676 = vpop.permute.xlu0 %675
    %v678 = vmul.f32 %v672, %v676
    %680 = vrot.lane.b32.xlu0 %v678, 32
    %v681 = vpop.permute.xlu0 %680
    %v683 = vadd.f32 %v673, %v681
    %v684 = vtanh.pop %v683
    %686 = vrot.lane.b32.xlu0 %v684, 64
    %v687 = vpop.permute.xlu0 %686
    %v689 = vmul.f32 %v672, %v687
    %v690 = vrot.slane %v585, 2
    %691 = vrot.lane.b32.xlu0 %v690, 32
    %v692 = vpop.permute.xlu0 %691
    %v693 = vsel %vm95, %v692, 0
    %695 = vmatprep.subr.mxu0 0.0
    %696 = vmatpush1.msra.mxu0 %v275
    %697 = vmatprep.subr.mxu0 0.0
    %698 = vmatpush1.msra.mxu0 %v276
    %699 = vmatprep.subr.mxu0 0.0
    %700 = vmatpush1.msra.mxu0 %v277
    %701 = vmatprep.subr.mxu0 0.0
    %702 = vmatpush1.msra.mxu0 %v278
    %703 = vmatprep.subr.mxu0 0.0
    %704 = vmatpush1.msra.mxu0 0.0
    %705 = vmatprep.subr.mxu0 0.0
    %706 = vmatpush1.msra.mxu0 0.0
    %707 = vmatprep.subr.mxu0 0.0
    %708 = vmatpush1.msra.mxu0 0.0
    %709 = vmatprep.subr.mxu0 0.0
    %710 = vmatpush1.msra.mxu0 0.0
    %711 = vmatprep.subr.mxu0 0.0
    %712 = vmatpush1.msra.mxu0 0.0
    %713 = vmatprep.subr.mxu0 0.0
    %714 = vmatpush1.msra.mxu0 0.0
    %715 = vmatprep.subr.mxu0 0.0
    %716 = vmatpush1.msra.mxu0 0.0
    %717 = vmatprep.subr.mxu0 0.0
    %718 = vmatpush1.msra.mxu0 0.0
    %719 = vmatprep.subr.mxu0 0.0
    %720 = vmatpush1.msra.mxu0 0.0
    %721 = vmatprep.subr.mxu0 0.0
    %722 = vmatpush1.msra.mxu0 0.0
    %723 = vmatprep.subr.mxu0 0.0
    %724 = vmatpush1.msra.mxu0 0.0
    %725 = vmatprep.subr.mxu0 0.0
    %726 = vmatpush1.msra.mxu0 0.0
    %727 = vmatprep.subr.mxu0 0.0
    %728 = vmatpush1.msra.mxu0 0.0
    %729 = vmatprep.subr.mxu0 0.0
    %730 = vmatpush1.msra.mxu0 0.0
    %731 = vmatprep.subr.mxu0 0.0
    %732 = vmatpush1.msra.mxu0 0.0
    %733 = vmatprep.subr.mxu0 0.0
    %734 = vmatpush1.msra.mxu0 0.0
    %735 = vmatprep.subr.mxu0 0.0
    %736 = vmatpush1.msra.mxu0 0.0
    %737 = vmatprep.subr.mxu0 0.0
    %738 = vmatpush1.msra.mxu0 0.0
    %739 = vmatprep.subr.mxu0 0.0
    %740 = vmatpush1.msra.mxu0 0.0
    %741 = vmatprep.subr.mxu0 0.0
    %742 = vmatpush1.msra.mxu0 0.0
    %743 = vmatprep.subr.mxu0 0.0
    %744 = vmatpush1.msra.mxu0 0.0
    %745 = vmatprep.subr.mxu0 0.0
    %746 = vmatpush1.msra.mxu0 0.0
    %747 = vmatprep.subr.mxu0 0.0
    %748 = vmatpush1.msra.mxu0 0.0
    %749 = vmatprep.subr.mxu0 0.0
    %750 = vmatpush1.msra.mxu0 0.0
    %751 = vmatprep.subr.mxu0 0.0
    %752 = vmatpush1.msra.mxu0 0.0
    %753 = vmatprep.subr.mxu0 0.0
    %754 = vmatpush1.msra.mxu0 0.0
    %755 = vmatprep.subr.mxu0 0.0
    %756 = vmatpush1.msra.mxu0 0.0
    %757 = vmatprep.subr.mxu0 0.0
    %758 = vmatpush1.msra.mxu0 0.0
    %759 = vmatprep.mubr.f32.mxu0 0.0
    %760 = vmatmul.mubr.f32.gmra.mrb[0].mxu0 %v693
    %v761 = vpop.f32.mrb[0].mxu0
    %v762 = vadd.f32 0.0, %v761
    %v763 = vpop.f32.mrb[0].mxu0
    %764 = vdwg.mxu0
    %v766 = vrot.slane %v762, 4
    %v768 = vadd.f32 %v267, %v766
    %v769 = vtanh.pop %v768
    %v770 = vmul.f32 %v769, 0.5
    %v771 = vadd.f32 %v770, 0.5
    %v773 = vrot.slane %v579, 6
    %v775 = vmul.f32 %v771, %v773
    %777 = vrot.lane.b32.xlu0 %v769, 64
    %v778 = vpop.permute.xlu0 %777
    %v780 = vmul.f32 %v771, %v778
    %782 = vrot.lane.b32.xlu0 %v780, 32
    %v783 = vpop.permute.xlu0 %782
    %v785 = vadd.f32 %v775, %v783
    %v786 = vtanh.pop %v785
    %788 = vrot.lane.b32.xlu0 %v786, 64
    %v789 = vpop.permute.xlu0 %788
    %v791 = vmul.f32 %v771, %v789
    %793 = vrot.lane.b32.xlu0 %v791, 32
    %v794 = vpop.permute.xlu0 %793
    %v797 = vrot.slane %v689, 4
    %798 = vrot.lane.b32.xlu0 %v797, 64
    %v799 = vpop.permute.xlu0 %798
    %v801 = vsel %vm95, %v794, %v799
    %v803 = vrot.slane %v801, 4
    %v804 = vsel %vm393, %v803, 0
    %806 = vmatprep.subr.mxu0 0.0
    %807 = vmatpush1.msra.mxu0 %v279
    %808 = vmatprep.subr.mxu0 0.0
    %809 = vmatpush1.msra.mxu0 %v280
    %810 = vmatprep.subr.mxu0 0.0
    %811 = vmatpush1.msra.mxu0 %v281
    %812 = vmatprep.subr.mxu0 0.0
    %813 = vmatpush1.msra.mxu0 %v282
    %814 = vmatprep.subr.mxu0 0.0
    %815 = vmatpush1.msra.mxu0 %v283
    %816 = vmatprep.subr.mxu0 0.0
    %817 = vmatpush1.msra.mxu0 %v284
    %818 = vmatprep.subr.mxu0 0.0
    %819 = vmatpush1.msra.mxu0 %v285
    %820 = vmatprep.subr.mxu0 0.0
    %821 = vmatpush1.msra.mxu0 %v286
    %822 = vmatprep.subr.mxu0 0.0
    %823 = vmatpush1.msra.mxu0 0.0
    %824 = vmatprep.subr.mxu0 0.0
    %825 = vmatpush1.msra.mxu0 0.0
    %826 = vmatprep.subr.mxu0 0.0
    %827 = vmatpush1.msra.mxu0 0.0
    %828 = vmatprep.subr.mxu0 0.0
    %829 = vmatpush1.msra.mxu0 0.0
    %830 = vmatprep.subr.mxu0 0.0
    %831 = vmatpush1.msra.mxu0 0.0
    %832 = vmatprep.subr.mxu0 0.0
    %833 = vmatpush1.msra.mxu0 0.0
    %834 = vmatprep.subr.mxu0 0.0
    %835 = vmatpush1.msra.mxu0 0.0
    %836 = vmatprep.subr.mxu0 0.0
    %837 = vmatpush1.msra.mxu0 0.0
    %838 = vmatprep.subr.mxu0 0.0
    %839 = vmatpush1.msra.mxu0 0.0
    %840 = vmatprep.subr.mxu0 0.0
    %841 = vmatpush1.msra.mxu0 0.0
    %842 = vmatprep.subr.mxu0 0.0
    %843 = vmatpush1.msra.mxu0 0.0
    %844 = vmatprep.subr.mxu0 0.0
    %845 = vmatpush1.msra.mxu0 0.0
    %846 = vmatprep.subr.mxu0 0.0
    %847 = vmatpush1.msra.mxu0 0.0
    %848 = vmatprep.subr.mxu0 0.0
    %849 = vmatpush1.msra.mxu0 0.0
    %850 = vmatprep.subr.mxu0 0.0
    %851 = vmatpush1.msra.mxu0 0.0
    %852 = vmatprep.subr.mxu0 0.0
    %853 = vmatpush1.msra.mxu0 0.0
    %854 = vmatprep.subr.mxu0 0.0
    %855 = vmatpush1.msra.mxu0 0.0
    %856 = vmatprep.subr.mxu0 0.0
    %857 = vmatpush1.msra.mxu0 0.0
    %858 = vmatprep.subr.mxu0 0.0
    %859 = vmatpush1.msra.mxu0 0.0
    %860 = vmatprep.subr.mxu0 0.0
    %861 = vmatpush1.msra.mxu0 0.0
    %862 = vmatprep.subr.mxu0 0.0
    %863 = vmatpush1.msra.mxu0 0.0
    %864 = vmatprep.subr.mxu0 0.0
    %865 = vmatpush1.msra.mxu0 0.0
    %866 = vmatprep.subr.mxu0 0.0
    %867 = vmatpush1.msra.mxu0 0.0
    %868 = vmatprep.subr.mxu0 0.0
    %869 = vmatpush1.msra.mxu0 0.0
    %870 = vmatprep.mubr.f32.mxu0 0.0
    %871 = vmatmul.mubr.f32.gmra.mrb[0].mxu0 %v804
    %v872 = vpop.f32.mrb[0].mxu0
    %v873 = vadd.f32 %v391, %v872
    %v874 = vpop.f32.mrb[0].mxu0
    %875 = vdwg.mxu0
    %v876 = vtanh.pop %v873
    %v877 = vmul.f32 %v876, 0.5
    %v878 = vadd.f32 %v877, 0.5
    %v879 = vmul.f32 %v878, %v683
    %881 = vrot.lane.b32.xlu0 %v876, 64
    %v882 = vpop.permute.xlu0 %881
    %v884 = vmul.f32 %v878, %v882
    %886 = vrot.lane.b32.xlu0 %v884, 32
    %v887 = vpop.permute.xlu0 %886
    %v889 = vadd.f32 %v879, %v887
    %v890 = vtanh.pop %v889
    %892 = vrot.lane.b32.xlu0 %v890, 64
    %v893 = vpop.permute.xlu0 %892
    %v895 = vmul.f32 %v878, %v893
    %v896 = vrot.slane %v791, 4
    %897 = vrot.lane.b32.xlu0 %v896, 32
    %v898 = vpop.permute.xlu0 %897
    %v899 = vsel %vm95, %v898, 0
    %901 = vmatprep.subr.mxu0 0.0
    %902 = vmatpush1.msra.mxu0 %v275
    %903 = vmatprep.subr.mxu0 0.0
    %904 = vmatpush1.msra.mxu0 %v276
    %905 = vmatprep.subr.mxu0 0.0
    %906 = vmatpush1.msra.mxu0 %v277
    %907 = vmatprep.subr.mxu0 0.0
    %908 = vmatpush1.msra.mxu0 %v278
    %909 = vmatprep.subr.mxu0 0.0
    %910 = vmatpush1.msra.mxu0 0.0
    %911 = vmatprep.subr.mxu0 0.0
    %912 = vmatpush1.msra.mxu0 0.0
    %913 = vmatprep.subr.mxu0 0.0
    %914 = vmatpush1.msra.mxu0 0.0
    %915 = vmatprep.subr.mxu0 0.0
    %916 = vmatpush1.msra.mxu0 0.0
    %917 = vmatprep.subr.mxu0 0.0
    %918 = vmatpush1.msra.mxu0 0.0
    %919 = vmatprep.subr.mxu0 0.0
    %920 = vmatpush1.msra.mxu0 0.0
    %921 = vmatprep.subr.mxu0 0.0
    %922 = vmatpush1.msra.mxu0 0.0
    %923 = vmatprep.subr.mxu0 0.0
    %924 = vmatpush1.msra.mxu0 0.0
    %925 = vmatprep.subr.mxu0 0.0
    %926 = vmatpush1.msra.mxu0 0.0
    %927 = vmatprep.subr.mxu0 0.0
    %928 = vmatpush1.msra.mxu0 0.0
    %929 = vmatprep.subr.mxu0 0.0
    %930 = vmatpush1.msra.mxu0 0.0
    %931 = vmatprep.subr.mxu0 0.0
    %932 = vmatpush1.msra.mxu0 0.0
    %933 = vmatprep.subr.mxu0 0.0
    %934 = vmatpush1.msra.mxu0 0.0
    %935 = vmatprep.subr.mxu0 0.0
    %936 = vmatpush1.msra.mxu0 0.0
    %937 = vmatprep.subr.mxu0 0.0
    %938 = vmatpush1.msra.mxu0 0.0
    %939 = vmatprep.subr.mxu0 0.0
    %940 = vmatpush1.msra.mxu0 0.0
    %941 = vmatprep.subr.mxu0 0.0
    %942 = vmatpush1.msra.mxu0 0.0
    %943 = vmatprep.subr.mxu0 0.0
    %944 = vmatpush1.msra.mxu0 0.0
    %945 = vmatprep.subr.mxu0 0.0
    %946 = vmatpush1.msra.mxu0 0.0
    %947 = vmatprep.subr.mxu0 0.0
    %948 = vmatpush1.msra.mxu0 0.0
    %949 = vmatprep.subr.mxu0 0.0
    %950 = vmatpush1.msra.mxu0 0.0
    %951 = vmatprep.subr.mxu0 0.0
    %952 = vmatpush1.msra.mxu0 0.0
    %953 = vmatprep.subr.mxu0 0.0
    %954 = vmatpush1.msra.mxu0 0.0
    %955 = vmatprep.subr.mxu0 0.0
    %956 = vmatpush1.msra.mxu0 0.0
    %957 = vmatprep.subr.mxu0 0.0
    %958 = vmatpush1.msra.mxu0 0.0
    %959 = vmatprep.subr.mxu0 0.0
    %960 = vmatpush1.msra.mxu0 0.0
    %961 = vmatprep.subr.mxu0 0.0
    %962 = vmatpush1.msra.mxu0 0.0
    %963 = vmatprep.subr.mxu0 0.0
    %964 = vmatpush1.msra.mxu0 0.0
    %965 = vmatprep.mubr.f32.mxu0 0.0
    %966 = vmatmul.mubr.f32.gmra.mrb[0].mxu0 %v899
    %v967 = vpop.f32.mrb[0].mxu0
    %v968 = vadd.f32 0.0, %v967
    %v969 = vpop.f32.mrb[0].mxu0
    %970 = vdwg.mxu0
    %v972 = vrot.slane %v968, 2
    %v974 = vadd.f32 %v267, %v972
    %v975 = vtanh.pop %v974
    %v976 = vmul.f32 %v975, 0.5
    %v977 = vadd.f32 %v976, 0.5
    %v979 = vrot.slane %v785, 6
    %v981 = vmul.f32 %v977, %v979
    %983 = vrot.lane.b32.xlu0 %v975, 64
    %v984 = vpop.permute.xlu0 %983
    %v986 = vmul.f32 %v977, %v984
    %988 = vrot.lane.b32.xlu0 %v986, 32
    %v989 = vpop.permute.xlu0 %988
    %v991 = vadd.f32 %v981, %v989
    %v992 = vtanh.pop %v991
    %994 = vrot.lane.b32.xlu0 %v992, 64
    %v995 = vpop.permute.xlu0 %994
    %v997 = vmul.f32 %v977, %v995
    %999 = vrot.lane.b32.xlu0 %v997, 32
    %v1000 = vpop.permute.xlu0 %999
    %v1003 = vrot.slane %v895, 2
    %1004 = vrot.lane.b32.xlu0 %v1003, 64
    %v1005 = vpop.permute.xlu0 %1004
    %v1007 = vsel %vm95, %v1000, %v1005
    %v1009 = vrot.slane %v1007, 6
    %v1010 = vsel %vm393, %v1009, 0
    %1012 = vmatprep.subr.mxu0 0.0
    %1013 = vmatpush1.msra.mxu0 %v279
    %1014 = vmatprep.subr.mxu0 0.0
    %1015 = vmatpush1.msra.mxu0 %v280
    %1016 = vmatprep.subr.mxu0 0.0
    %1017 = vmatpush1.msra.mxu0 %v281
    %1018 = vmatprep.subr.mxu0 0.0
    %1019 = vmatpush1.msra.mxu0 %v282
    %1020 = vmatprep.subr.mxu0 0.0
    %1021 = vmatpush1.msra.mxu0 %v283
    %1022 = vmatprep.subr.mxu0 0.0
    %1023 = vmatpush1.msra.mxu0 %v284
    %1024 = vmatprep.subr.mxu0 0.0
    %1025 = vmatpush1.msra.mxu0 %v285
    %1026 = vmatprep.subr.mxu0 0.0
    %1027 = vmatpush1.msra.mxu0 %v286
    %1028 = vmatprep.subr.mxu0 0.0
    %1029 = vmatpush1.msra.mxu0 0.0
    %1030 = vmatprep.subr.mxu0 0.0
    %1031 = vmatpush1.msra.mxu0 0.0
    %1032 = vmatprep.subr.mxu0 0.0
    %1033 = vmatpush1.msra.mxu0 0.0
    %1034 = vmatprep.subr.mxu0 0.0
    %1035 = vmatpush1.msra.mxu0 0.0
    %1036 = vmatprep.subr.mxu0 0.0
    %1037 = vmatpush1.msra.mxu0 0.0
    %1038 = vmatprep.subr.mxu0 0.0
    %1039 = vmatpush1.msra.mxu0 0.0
    %1040 = vmatprep.subr.mxu0 0.0
    %1041 = vmatpush1.msra.mxu0 0.0
    %1042 = vmatprep.subr.mxu0 0.0
    %1043 = vmatpush1.msra.mxu0 0.0
    %1044 = vmatprep.subr.mxu0 0.0
    %1045 = vmatpush1.msra.mxu0 0.0
    %1046 = vmatprep.subr.mxu0 0.0
    %1047 = vmatpush1.msra.mxu0 0.0
    %1048 = vmatprep.subr.mxu0 0.0
    %1049 = vmatpush1.msra.mxu0 0.0
    %1050 = vmatprep.subr.mxu0 0.0
    %1051 = vmatpush1.msra.mxu0 0.0
    %1052 = vmatprep.subr.mxu0 0.0
    %1053 = vmatpush1.msra.mxu0 0.0
    %1054 = vmatprep.subr.mxu0 0.0
    %1055 = vmatpush1.msra.mxu0 0.0
    %1056 = vmatprep.subr.mxu0 0.0
    %1057 = vmatpush1.msra.mxu0 0.0
    %1058 = vmatprep.subr.mxu0 0.0
    %1059 = vmatpush1.msra.mxu0 0.0
    %1060 = vmatprep.subr.mxu0 0.0
    %1061 = vmatpush1.msra.mxu0 0.0
    %1062 = vmatprep.subr.mxu0 0.0
    %1063 = vmatpush1.msra.mxu0 0.0
    %1064 = vmatprep.subr.mxu0 0.0
    %1065 = vmatpush1.msra.mxu0 0.0
    %1066 = vmatprep.subr.mxu0 0.0
    %1067 = vmatpush1.msra.mxu0 0.0
    %1068 = vmatprep.subr.mxu0 0.0
    %1069 = vmatpush1.msra.mxu0 0.0
    %1070 = vmatprep.subr.mxu0 0.0
    %1071 = vmatpush1.msra.mxu0 0.0
    %1072 = vmatprep.subr.mxu0 0.0
    %1073 = vmatpush1.msra.mxu0 0.0
    %1074 = vmatprep.subr.mxu0 0.0
    %1075 = vmatpush1.msra.mxu0 0.0
    %1076 = vmatprep.mubr.f32.mxu0 0.0
    %1077 = vmatmul.mubr.f32.gmra.mrb[0].mxu0 %v1010
    %v1078 = vpop.f32.mrb[0].mxu0
    %v1079 = vadd.f32 %v391, %v1078
    %v1080 = vpop.f32.mrb[0].mxu0
    %1081 = vdwg.mxu0
    %v1082 = vtanh.pop %v1079
    %v1083 = vmul.f32 %v1082, 0.5
    %v1084 = vadd.f32 %v1083, 0.5
    %v1085 = vmul.f32 %v1084, %v889
    %1087 = vrot.lane.b32.xlu0 %v1082, 64
    %v1088 = vpop.permute.xlu0 %1087
    %v1090 = vmul.f32 %v1084, %v1088
    %1092 = vrot.lane.b32.xlu0 %v1090, 32
    %v1093 = vpop.permute.xlu0 %1092
    %v1095 = vadd.f32 %v1085, %v1093
    %v1096 = vtanh.pop %v1095
    %1098 = vrot.lane.b32.xlu0 %v1096, 64
    %v1099 = vpop.permute.xlu0 %1098
    %v1101 = vmul.f32 %v1084, %v1099
    %v1102 = vrot.slane %v997, 6
    %1103 = vrot.lane.b32.xlu0 %v1102, 32
    %v1104 = vpop.permute.xlu0 %1103
    %v1105 = vsel %vm95, %v1104, 0
    %1107 = vmatprep.subr.mxu0 0.0
    %1108 = vmatpush1.msra.mxu0 %v275
    %1109 = vmatprep.subr.mxu0 0.0
    %1110 = vmatpush1.msra.mxu0 %v276
    %1111 = vmatprep.subr.mxu0 0.0
    %1112 = vmatpush1.msra.mxu0 %v277
    %1113 = vmatprep.subr.mxu0 0.0
    %1114 = vmatpush1.msra.mxu0 %v278
    %1115 = vmatprep.subr.mxu0 0.0
    %1116 = vmatpush1.msra.mxu0 0.0
    %1117 = vmatprep.subr.mxu0 0.0
    %1118 = vmatpush1.msra.mxu0 0.0
    %1119 = vmatprep.subr.mxu0 0.0
    %1120 = vmatpush1.msra.mxu0 0.0
    %1121 = vmatprep.subr.mxu0 0.0
    %1122 = vmatpush1.msra.mxu0 0.0
    %1123 = vmatprep.subr.mxu0 0.0
    %1124 = vmatpush1.msra.mxu0 0.0
    %1125 = vmatprep.subr.mxu0 0.0
    %1126 = vmatpush1.msra.mxu0 0.0
    %1127 = vmatprep.subr.mxu0 0.0
    %1128 = vmatpush1.msra.mxu0 0.0
    %1129 = vmatprep.subr.mxu0 0.0
    %1130 = vmatpush1.msra.mxu0 0.0
    %1131 = vmatprep.subr.mxu0 0.0
    %1132 = vmatpush1.msra.mxu0 0.0
    %1133 = vmatprep.subr.mxu0 0.0
    %1134 = vmatpush1.msra.mxu0 0.0
    %1135 = vmatprep.subr.mxu0 0.0
    %1136 = vmatpush1.msra.mxu0 0.0
    %1137 = vmatprep.subr.mxu0 0.0
    %1138 = vmatpush1.msra.mxu0 0.0
    %1139 = vmatprep.subr.mxu0 0.0
    %1140 = vmatpush1.msra.mxu0 0.0
    %1141 = vmatprep.subr.mxu0 0.0
    %1142 = vmatpush1.msra.mxu0 0.0
    %1143 = vmatprep.subr.mxu0 0.0
    %1144 = vmatpush1.msra.mxu0 0.0
    %1145 = vmatprep.subr.mxu0 0.0
    %1146 = vmatpush1.msra.mxu0 0.0
    %1147 = vmatprep.subr.mxu0 0.0
    %1148 = vmatpush1.msra.mxu0 0.0
    %1149 = vmatprep.subr.mxu0 0.0
    %1150 = vmatpush1.msra.mxu0 0.0
    %1151 = vmatprep.subr.mxu0 0.0
    %1152 = vmatpush1.msra.mxu0 0.0
    %1153 = vmatprep.subr.mxu0 0.0
    %1154 = vmatpush1.msra.mxu0 0.0
    %1155 = vmatprep.subr.mxu0 0.0
    %1156 = vmatpush1.msra.mxu0 0.0
    %1157 = vmatprep.subr.mxu0 0.0
    %1158 = vmatpush1.msra.mxu0 0.0
    %1159 = vmatprep.subr.mxu0 0.0
    %1160 = vmatpush1.msra.mxu0 0.0
    %1161 = vmatprep.subr.mxu0 0.0
    %1162 = vmatpush1.msra.mxu0 0.0
    %1163 = vmatprep.subr.mxu0 0.0
    %1164 = vmatpush1.msra.mxu0 0.0
    %1165 = vmatprep.subr.mxu0 0.0
    %1166 = vmatpush1.msra.mxu0 0.0
    %1167 = vmatprep.subr.mxu0 0.0
    %1168 = vmatpush1.msra.mxu0 0.0
    %1169 = vmatprep.subr.mxu0 0.0
    %1170 = vmatpush1.msra.mxu0 0.0
    %1171 = vmatprep.mubr.f32.mxu0 0.0
    %1172 = vmatmul.mubr.f32.gmra.mrb[0].mxu0 %v1105
    %v1173 = vpop.f32.mrb[0].mxu0
    %v1174 = vadd.f32 0.0, %v1173
    %v1175 = vpop.f32.mrb[0].mxu0
    %1176 = vdwg.mxu0
    %v1177 = vadd.f32 %v272, %v1174
    %v1178 = vtanh.pop %v1177
    %v1179 = vmul.f32 %v1178, 0.5
    %v1180 = vadd.f32 %v1179, 0.5
    %v1182 = vrot.slane %v991, 6
    %v1184 = vmul.f32 %v1180, %v1182
    %1186 = vrot.lane.b32.xlu0 %v1178, 64
    %v1187 = vpop.permute.xlu0 %1186
    %v1189 = vmul.f32 %v1180, %v1187
    %1191 = vrot.lane.b32.xlu0 %v1189, 32
    %v1192 = vpop.permute.xlu0 %1191
    %v1194 = vadd.f32 %v1184, %v1192
    %v1195 = vtanh.pop %v1194
    %1197 = vrot.lane.b32.xlu0 %v1195, 64
    %v1198 = vpop.permute.xlu0 %1197
    %v1200 = vmul.f32 %v1180, %v1198
    %1202 = vrot.lane.b32.xlu0 %v1200, 32
    %v1203 = vpop.permute.xlu0 %1202
    %1206 = vrot.lane.b32.xlu0 %v1101, 64
    %v1207 = vpop.permute.xlu0 %1206
    %v1209 = vsel %vm95, %v1203, %v1207
    %v1211 = vsel %vm393, %v1209, 0
    %1213 = vmatprep.subr.mxu0 0.0
    %1214 = vmatpush1.msra.mxu0 %v279
    %1215 = vmatprep.subr.mxu0 0.0
    %1216 = vmatpush1.msra.mxu0 %v280
    %1217 = vmatprep.subr.mxu0 0.0
    %1218 = vmatpush1.msra.mxu0 %v281
    %1219 = vmatprep.subr.mxu0 0.0
    %1220 = vmatpush1.msra.mxu0 %v282
    %1221 = vmatprep.subr.mxu0 0.0
    %1222 = vmatpush1.msra.mxu0 %v283
    %1223 = vmatprep.subr.mxu0 0.0
    %1224 = vmatpush1.msra.mxu0 %v284
    %1225 = vmatprep.subr.mxu0 0.0
    %1226 = vmatpush1.msra.mxu0 %v285
    %1227 = vmatprep.subr.mxu0 0.0
    %1228 = vmatpush1.msra.mxu0 %v286
    %1229 = vmatprep.subr.mxu0 0.0
    %1230 = vmatpush1.msra.mxu0 0.0
    %1231 = vmatprep.subr.mxu0 0.0
    %1232 = vmatpush1.msra.mxu0 0.0
    %1233 = vmatprep.subr.mxu0 0.0
    %1234 = vmatpush1.msra.mxu0 0.0
    %1235 = vmatprep.subr.mxu0 0.0
    %1236 = vmatpush1.msra.mxu0 0.0
    %1237 = vmatprep.subr.mxu0 0.0
    %1238 = vmatpush1.msra.mxu0 0.0
    %1239 = vmatprep.subr.mxu0 0.0
    %1240 = vmatpush1.msra.mxu0 0.0
    %1241 = vmatprep.subr.mxu0 0.0
    %1242 = vmatpush1.msra.mxu0 0.0
    %1243 = vmatprep.subr.mxu0 0.0
    %1244 = vmatpush1.msra.mxu0 0.0
    %1245 = vmatprep.subr.mxu0 0.0
    %1246 = vmatpush1.msra.mxu0 0.0
    %1247 = vmatprep.subr.mxu0 0.0
    %1248 = vmatpush1.msra.mxu0 0.0
    %1249 = vmatprep.subr.mxu0 0.0
    %1250 = vmatpush1.msra.mxu0 0.0
    %1251 = vmatprep.subr.mxu0 0.0
    %1252 = vmatpush1.msra.mxu0 0.0
    %1253 = vmatprep.subr.mxu0 0.0
    %1254 = vmatpush1.msra.mxu0 0.0
    %1255 = vmatprep.subr.mxu0 0.0
    %1256 = vmatpush1.msra.mxu0 0.0
    %1257 = vmatprep.subr.mxu0 0.0
    %1258 = vmatpush1.msra.mxu0 0.0
    %1259 = vmatprep.subr.mxu0 0.0
    %1260 = vmatpush1.msra.mxu0 0.0
    %1261 = vmatprep.subr.mxu0 0.0
    %1262 = vmatpush1.msra.mxu0 0.0
    %1263 = vmatprep.subr.mxu0 0.0
    %1264 = vmatpush1.msra.mxu0 0.0
    %1265 = vmatprep.subr.mxu0 0.0
    %1266 = vmatpush1.msra.mxu0 0.0
    %1267 = vmatprep.subr.mxu0 0.0
    %1268 = vmatpush1.msra.mxu0 0.0
    %1269 = vmatprep.subr.mxu0 0.0
    %1270 = vmatpush1.msra.mxu0 0.0
    %1271 = vmatprep.subr.mxu0 0.0
    %1272 = vmatpush1.msra.mxu0 0.0
    %1273 = vmatprep.subr.mxu0 0.0
    %1274 = vmatpush1.msra.mxu0 0.0
    %1275 = vmatprep.subr.mxu0 0.0
    %1276 = vmatpush1.msra.mxu0 0.0
    %1277 = vmatprep.mubr.f32.mxu0 0.0
    %1278 = vmatmul.mubr.f32.gmra.mrb[0].mxu0 %v1211
    %v1279 = vpop.f32.mrb[0].mxu0
    %v1280 = vadd.f32 %v391, %v1279
    %v1281 = vpop.f32.mrb[0].mxu0
    %1282 = vdwg.mxu0
    %v1283 = vtanh.pop %v1280
    %v1284 = vmul.f32 %v1283, 0.5
    %v1285 = vadd.f32 %v1284, 0.5
    %v1286 = vmul.f32 %v1285, %v1095
    %1288 = vrot.lane.b32.xlu0 %v1283, 64
    %v1289 = vpop.permute.xlu0 %1288
    %v1291 = vmul.f32 %v1285, %v1289
    %1293 = vrot.lane.b32.xlu0 %v1291, 32
    %v1294 = vpop.permute.xlu0 %1293
    %v1296 = vadd.f32 %v1286, %v1294
    %v1297 = vtanh.pop %v1296
    %1299 = vrot.lane.b32.xlu0 %v1297, 64
    %v1300 = vpop.permute.xlu0 %1299
    %v1302 = vmul.f32 %v1285, %v1300
    %v1303 = vsel %vm95, %v1203, 0
    %1305 = vmatprep.subr.mxu0 0.0
    %1306 = vmatpush1.msra.mxu0 %v275
    %1307 = vmatprep.subr.mxu0 0.0
    %1308 = vmatpush1.msra.mxu0 %v276
    %1309 = vmatprep.subr.mxu0 0.0
    %1310 = vmatpush1.msra.mxu0 %v277
    %1311 = vmatprep.subr.mxu0 0.0
    %1312 = vmatpush1.msra.mxu0 %v278
    %1313 = vmatprep.subr.mxu0 0.0
    %1314 = vmatpush1.msra.mxu0 0.0
    %1315 = vmatprep.subr.mxu0 0.0
    %1316 = vmatpush1.msra.mxu0 0.0
    %1317 = vmatprep.subr.mxu0 0.0
    %1318 = vmatpush1.msra.mxu0 0.0
    %1319 = vmatprep.subr.mxu0 0.0
    %1320 = vmatpush1.msra.mxu0 0.0
    %1321 = vmatprep.subr.mxu0 0.0
    %1322 = vmatpush1.msra.mxu0 0.0
    %1323 = vmatprep.subr.mxu0 0.0
    %1324 = vmatpush1.msra.mxu0 0.0
    %1325 = vmatprep.subr.mxu0 0.0
    %1326 = vmatpush1.msra.mxu0 0.0
    %1327 = vmatprep.subr.mxu0 0.0
    %1328 = vmatpush1.msra.mxu0 0.0
    %1329 = vmatprep.subr.mxu0 0.0
    %1330 = vmatpush1.msra.mxu0 0.0
    %1331 = vmatprep.subr.mxu0 0.0
    %1332 = vmatpush1.msra.mxu0 0.0
    %1333 = vmatprep.subr.mxu0 0.0
    %1334 = vmatpush1.msra.mxu0 0.0
    %1335 = vmatprep.subr.mxu0 0.0
    %1336 = vmatpush1.msra.mxu0 0.0
    %1337 = vmatprep.subr.mxu0 0.0
    %1338 = vmatpush1.msra.mxu0 0.0
    %1339 = vmatprep.subr.mxu0 0.0
    %1340 = vmatpush1.msra.mxu0 0.0
    %1341 = vmatprep.subr.mxu0 0.0
    %1342 = vmatpush1.msra.mxu0 0.0
    %1343 = vmatprep.subr.mxu0 0.0
    %1344 = vmatpush1.msra.mxu0 0.0
    %1345 = vmatprep.subr.mxu0 0.0
    %1346 = vmatpush1.msra.mxu0 0.0
    %1347 = vmatprep.subr.mxu0 0.0
    %1348 = vmatpush1.msra.mxu0 0.0
    %1349 = vmatprep.subr.mxu0 0.0
    %1350 = vmatpush1.msra.mxu0 0.0
    %1351 = vmatprep.subr.mxu0 0.0
    %1352 = vmatpush1.msra.mxu0 0.0
    %1353 = vmatprep.subr.mxu0 0.0
    %1354 = vmatpush1.msra.mxu0 0.0
    %1355 = vmatprep.subr.mxu0 0.0
    %1356 = vmatpush1.msra.mxu0 0.0
    %1357 = vmatprep.subr.mxu0 0.0
    %1358 = vmatpush1.msra.mxu0 0.0
    %1359 = vmatprep.subr.mxu0 0.0
    %1360 = vmatpush1.msra.mxu0 0.0
    %1361 = vmatprep.subr.mxu0 0.0
    %1362 = vmatpush1.msra.mxu0 0.0
    %1363 = vmatprep.subr.mxu0 0.0
    %1364 = vmatpush1.msra.mxu0 0.0
    %1365 = vmatprep.subr.mxu0 0.0
    %1366 = vmatpush1.msra.mxu0 0.0
    %1367 = vmatprep.subr.mxu0 0.0
    %1368 = vmatpush1.msra.mxu0 0.0
    %1369 = vmatprep.mubr.f32.mxu0 0.0
    %1370 = vmatmul.mubr.f32.gmra.mrb[0].mxu0 %v1303
    %v1371 = vpop.f32.mrb[0].mxu0
    %v1372 = vadd.f32 0.0, %v1371
    %v1373 = vpop.f32.mrb[0].mxu0
    %1374 = vdwg.mxu0
    %v1376 = vrot.slane %v1372, 6
    %v1378 = vadd.f32 %v272, %v1376
    %v1379 = vtanh.pop %v1378
    %v1380 = vmul.f32 %v1379, 0.5
    %v1381 = vadd.f32 %v1380, 0.5
    %v1383 = vrot.slane %v1194, 6
    %v1385 = vmul.f32 %v1381, %v1383
    %1387 = vrot.lane.b32.xlu0 %v1379, 64
    %v1388 = vpop.permute.xlu0 %1387
    %v1390 = vmul.f32 %v1381, %v1388
    %1392 = vrot.lane.b32.xlu0 %v1390, 32
    %v1393 = vpop.permute.xlu0 %1392
    %v1395 = vadd.f32 %v1385, %v1393
    %v1396 = vtanh.pop %v1395
    %1398 = vrot.lane.b32.xlu0 %v1396, 64
    %v1399 = vpop.permute.xlu0 %1398
    %v1401 = vmul.f32 %v1381, %v1399
    %1403 = vrot.lane.b32.xlu0 %v1401, 32
    %v1404 = vpop.permute.xlu0 %1403
    %v1407 = vrot.slane %v1302, 6
    %1408 = vrot.lane.b32.xlu0 %v1407, 64
    %v1409 = vpop.permute.xlu0 %1408
    %v1411 = vsel %vm95, %v1404, %v1409
    %v1413 = vrot.slane %v1411, 2
    %v1414 = vsel %vm393, %v1413, 0
    %1416 = vmatprep.subr.mxu0 0.0
    %1417 = vmatpush1.msra.mxu0 %v279
    %1418 = vmatprep.subr.mxu0 0.0
    %1419 = vmatpush1.msra.mxu0 %v280
    %1420 = vmatprep.subr.mxu0 0.0
    %1421 = vmatpush1.msra.mxu0 %v281
    %1422 = vmatprep.subr.mxu0 0.0
    %1423 = vmatpush1.msra.mxu0 %v282
    %1424 = vmatprep.subr.mxu0 0.0
    %1425 = vmatpush1.msra.mxu0 %v283
    %1426 = vmatprep.subr.mxu0 0.0
    %1427 = vmatpush1.msra.mxu0 %v284
    %1428 = vmatprep.subr.mxu0 0.0
    %1429 = vmatpush1.msra.mxu0 %v285
    %1430 = vmatprep.subr.mxu0 0.0
    %1431 = vmatpush1.msra.mxu0 %v286
    %1432 = vmatprep.subr.mxu0 0.0
    %1433 = vmatpush1.msra.mxu0 0.0
    %1434 = vmatprep.subr.mxu0 0.0
    %1435 = vmatpush1.msra.mxu0 0.0
    %1436 = vmatprep.subr.mxu0 0.0
    %1437 = vmatpush1.msra.mxu0 0.0
    %1438 = vmatprep.subr.mxu0 0.0
    %1439 = vmatpush1.msra.mxu0 0.0
    %1440 = vmatprep.subr.mxu0 0.0
    %1441 = vmatpush1.msra.mxu0 0.0
    %1442 = vmatprep.subr.mxu0 0.0
    %1443 = vmatpush1.msra.mxu0 0.0
    %1444 = vmatprep.subr.mxu0 0.0
    %1445 = vmatpush1.msra.mxu0 0.0
    %1446 = vmatprep.subr.mxu0 0.0
    %1447 = vmatpush1.msra.mxu0 0.0
    %1448 = vmatprep.subr.mxu0 0.0
    %1449 = vmatpush1.msra.mxu0 0.0
    %1450 = vmatprep.subr.mxu0 0.0
    %1451 = vmatpush1.msra.mxu0 0.0
    %1452 = vmatprep.subr.mxu0 0.0
    %1453 = vmatpush1.msra.mxu0 0.0
    %1454 = vmatprep.subr.mxu0 0.0
    %1455 = vmatpush1.msra.mxu0 0.0
    %1456 = vmatprep.subr.mxu0 0.0
    %1457 = vmatpush1.msra.mxu0 0.0
    %1458 = vmatprep.subr.mxu0 0.0
    %1459 = vmatpush1.msra.mxu0 0.0
    %1460 = vmatprep.subr.mxu0 0.0
    %1461 = vmatpush1.msra.mxu0 0.0
    %1462 = vmatprep.subr.mxu0 0.0
    %1463 = vmatpush1.msra.mxu0 0.0
    %1464 = vmatprep.subr.mxu0 0.0
    %1465 = vmatpush1.msra.mxu0 0.0
    %1466 = vmatprep.subr.mxu0 0.0
    %1467 = vmatpush1.msra.mxu0 0.0
    %1468 = vmatprep.subr.mxu0 0.0
    %1469 = vmatpush1.msra.mxu0 0.0
    %1470 = vmatprep.subr.mxu0 0.0
    %1471 = vmatpush1.msra.mxu0 0.0
    %1472 = vmatprep.subr.mxu0 0.0
    %1473 = vmatpush1.msra.mxu0 0.0
    %1474 = vmatprep.subr.mxu0 0.0
    %1475 = vmatpush1.msra.mxu0 0.0
    %1476 = vmatprep.subr.mxu0 0.0
    %1477 = vmatpush1.msra.mxu0 0.0
    %1478 = vmatprep.subr.mxu0 0.0
    %1479 = vmatpush1.msra.mxu0 0.0
    %1480 = vmatprep.mubr.f32.mxu0 0.0
    %1481 = vmatmul.mubr.f32.gmra.mrb[0].mxu0 %v1414
    %v1482 = vpop.f32.mrb[0].mxu0
    %v1483 = vadd.f32 %v391, %v1482
    %v1484 = vpop.f32.mrb[0].mxu0
    %1485 = vdwg.mxu0
    %v1486 = vtanh.pop %v1483
    %v1487 = vmul.f32 %v1486, 0.5
    %v1488 = vadd.f32 %v1487, 0.5
    %v1489 = vmul.f32 %v1488, %v1296
    %1491 = vrot.lane.b32.xlu0 %v1486, 64
    %v1492 = vpop.permute.xlu0 %1491
    %v1494 = vmul.f32 %v1488, %v1492
    %1496 = vrot.lane.b32.xlu0 %v1494, 32
    %v1497 = vpop.permute.xlu0 %1496
    %v1499 = vadd.f32 %v1489, %v1497
    %v1500 = vtanh.pop %v1499
    %1502 = vrot.lane.b32.xlu0 %v1500, 64
    %v1503 = vpop.permute.xlu0 %1502
    %v1505 = vmul.f32 %v1488, %v1503
    %v1506 = vrot.slane %v1401, 2
    %1507 = vrot.lane.b32.xlu0 %v1506, 32
    %v1508 = vpop.permute.xlu0 %1507
    %v1509 = vsel %vm95, %v1508, 0
    %1511 = vmatprep.subr.mxu0 0.0
    %1512 = vmatpush1.msra.mxu0 %v275
    %1513 = vmatprep.subr.mxu0 0.0
    %1514 = vmatpush1.msra.mxu0 %v276
    %1515 = vmatprep.subr.mxu0 0.0
    %1516 = vmatpush1.msra.mxu0 %v277
    %1517 = vmatprep.subr.mxu0 0.0
    %1518 = vmatpush1.msra.mxu0 %v278
    %1519 = vmatprep.subr.mxu0 0.0
    %1520 = vmatpush1.msra.mxu0 0.0
    %1521 = vmatprep.subr.mxu0 0.0
    %1522 = vmatpush1.msra.mxu0 0.0
    %1523 = vmatprep.subr.mxu0 0.0
    %1524 = vmatpush1.msra.mxu0 0.0
    %1525 = vmatprep.subr.mxu0 0.0
    %1526 = vmatpush1.msra.mxu0 0.0
    %1527 = vmatprep.subr.mxu0 0.0
    %1528 = vmatpush1.msra.mxu0 0.0
    %1529 = vmatprep.subr.mxu0 0.0
    %1530 = vmatpush1.msra.mxu0 0.0
    %1531 = vmatprep.subr.mxu0 0.0
    %1532 = vmatpush1.msra.mxu0 0.0
    %1533 = vmatprep.subr.mxu0 0.0
    %1534 = vmatpush1.msra.mxu0 0.0
    %1535 = vmatprep.subr.mxu0 0.0
    %1536 = vmatpush1.msra.mxu0 0.0
    %1537 = vmatprep.subr.mxu0 0.0
    %1538 = vmatpush1.msra.mxu0 0.0
    %1539 = vmatprep.subr.mxu0 0.0
    %1540 = vmatpush1.msra.mxu0 0.0
    %1541 = vmatprep.subr.mxu0 0.0
    %1542 = vmatpush1.msra.mxu0 0.0
    %1543 = vmatprep.subr.mxu0 0.0
    %1544 = vmatpush1.msra.mxu0 0.0
    %1545 = vmatprep.subr.mxu0 0.0
    %1546 = vmatpush1.msra.mxu0 0.0
    %1547 = vmatprep.subr.mxu0 0.0
    %1548 = vmatpush1.msra.mxu0 0.0
    %1549 = vmatprep.subr.mxu0 0.0
    %1550 = vmatpush1.msra.mxu0 0.0
    %1551 = vmatprep.subr.mxu0 0.0
    %1552 = vmatpush1.msra.mxu0 0.0
    %1553 = vmatprep.subr.mxu0 0.0
    %1554 = vmatpush1.msra.mxu0 0.0
    %1555 = vmatprep.subr.mxu0 0.0
    %1556 = vmatpush1.msra.mxu0 0.0
    %1557 = vmatprep.subr.mxu0 0.0
    %1558 = vmatpush1.msra.mxu0 0.0
    %1559 = vmatprep.subr.mxu0 0.0
    %1560 = vmatpush1.msra.mxu0 0.0
    %1561 = vmatprep.subr.mxu0 0.0
    %1562 = vmatpush1.msra.mxu0 0.0
    %1563 = vmatprep.subr.mxu0 0.0
    %1564 = vmatpush1.msra.mxu0 0.0
    %1565 = vmatprep.subr.mxu0 0.0
    %1566 = vmatpush1.msra.mxu0 0.0
    %1567 = vmatprep.subr.mxu0 0.0
    %1568 = vmatpush1.msra.mxu0 0.0
    %1569 = vmatprep.subr.mxu0 0.0
    %1570 = vmatpush1.msra.mxu0 0.0
    %1571 = vmatprep.subr.mxu0 0.0
    %1572 = vmatpush1.msra.mxu0 0.0
    %1573 = vmatprep.subr.mxu0 0.0
    %1574 = vmatpush1.msra.mxu0 0.0
    %1575 = vmatprep.mubr.f32.mxu0 0.0
    %1576 = vmatmul.mubr.f32.gmra.mrb[0].mxu0 %v1509
    %v1577 = vpop.f32.mrb[0].mxu0
    %v1578 = vadd.f32 0.0, %v1577
    %v1579 = vpop.f32.mrb[0].mxu0
    %1580 = vdwg.mxu0
    %v1582 = vrot.slane %v1578, 4
    %v1584 = vadd.f32 %v272, %v1582
    %v1585 = vtanh.pop %v1584
    %v1586 = vmul.f32 %v1585, 0.5
    %v1587 = vadd.f32 %v1586, 0.5
    %v1589 = vrot.slane %v1395, 6
    %v1591 = vmul.f32 %v1587, %v1589
    %1593 = vrot.lane.b32.xlu0 %v1585, 64
    %v1594 = vpop.permute.xlu0 %1593
    %v1596 = vmul.f32 %v1587, %v1594
    %1598 = vrot.lane.b32.xlu0 %v1596, 32
    %v1599 = vpop.permute.xlu0 %1598
    %v1601 = vadd.f32 %v1591, %v1599
    %v1602 = vtanh.pop %v1601
    %1604 = vrot.lane.b32.xlu0 %v1602, 64
    %v1605 = vpop.permute.xlu0 %1604
    %v1607 = vmul.f32 %v1587, %v1605
    %1609 = vrot.lane.b32.xlu0 %v1607, 32
    %v1610 = vpop.permute.xlu0 %1609
    %v1613 = vrot.slane %v1505, 4
    %1614 = vrot.lane.b32.xlu0 %v1613, 64
    %v1615 = vpop.permute.xlu0 %1614
    %v1617 = vsel %vm95, %v1610, %v1615
    %v1619 = vrot.slane %v1617, 4
    %v1620 = vsel %vm393, %v1619, 0
    %1622 = vmatprep.subr.mxu0 0.0
    %1623 = vmatpush1.msra.mxu0 %v279
    %1624 = vmatprep.subr.mxu0 0.0
    %1625 = vmatpush1.msra.mxu0 %v280
    %1626 = vmatprep.subr.mxu0 0.0
    %1627 = vmatpush1.msra.mxu0 %v281
    %1628 = vmatprep.subr.mxu0 0.0
    %1629 = vmatpush1.msra.mxu0 %v282
    %1630 = vmatprep.subr.mxu0 0.0
    %1631 = vmatpush1.msra.mxu0 %v283
    %1632 = vmatprep.subr.mxu0 0.0
    %1633 = vmatpush1.msra.mxu0 %v284
    %1634 = vmatprep.subr.mxu0 0.0
    %1635 = vmatpush1.msra.mxu0 %v285
    %1636 = vmatprep.subr.mxu0 0.0
    %1637 = vmatpush1.msra.mxu0 %v286
    %1638 = vmatprep.subr.mxu0 0.0
    %1639 = vmatpush1.msra.mxu0 0.0
    %1640 = vmatprep.subr.mxu0 0.0
    %1641 = vmatpush1.msra.mxu0 0.0
    %1642 = vmatprep.subr.mxu0 0.0
    %1643 = vmatpush1.msra.mxu0 0.0
    %1644 = vmatprep.subr.mxu0 0.0
    %1645 = vmatpush1.msra.mxu0 0.0
    %1646 = vmatprep.subr.mxu0 0.0
    %1647 = vmatpush1.msra.mxu0 0.0
    %1648 = vmatprep.subr.mxu0 0.0
    %1649 = vmatpush1.msra.mxu0 0.0
    %1650 = vmatprep.subr.mxu0 0.0
    %1651 = vmatpush1.msra.mxu0 0.0
    %1652 = vmatprep.subr.mxu0 0.0
    %1653 = vmatpush1.msra.mxu0 0.0
    %1654 = vmatprep.subr.mxu0 0.0
    %1655 = vmatpush1.msra.mxu0 0.0
    %1656 = vmatprep.subr.mxu0 0.0
    %1657 = vmatpush1.msra.mxu0 0.0
    %1658 = vmatprep.subr.mxu0 0.0
    %1659 = vmatpush1.msra.mxu0 0.0
    %1660 = vmatprep.subr.mxu0 0.0
    %1661 = vmatpush1.msra.mxu0 0.0
    %1662 = vmatprep.subr.mxu0 0.0
    %1663 = vmatpush1.msra.mxu0 0.0
    %1664 = vmatprep.subr.mxu0 0.0
    %1665 = vmatpush1.msra.mxu0 0.0
    %1666 = vmatprep.subr.mxu0 0.0
    %1667 = vmatpush1.msra.mxu0 0.0
    %1668 = vmatprep.subr.mxu0 0.0
    %1669 = vmatpush1.msra.mxu0 0.0
    %1670 = vmatprep.subr.mxu0 0.0
    %1671 = vmatpush1.msra.mxu0 0.0
    %1672 = vmatprep.subr.mxu0 0.0
    %1673 = vmatpush1.msra.mxu0 0.0
    %1674 = vmatprep.subr.mxu0 0.0
    %1675 = vmatpush1.msra.mxu0 0.0
    %1676 = vmatprep.subr.mxu0 0.0
    %1677 = vmatpush1.msra.mxu0 0.0
    %1678 = vmatprep.subr.mxu0 0.0
    %1679 = vmatpush1.msra.mxu0 0.0
    %1680 = vmatprep.subr.mxu0 0.0
    %1681 = vmatpush1.msra.mxu0 0.0
    %1682 = vmatprep.subr.mxu0 0.0
    %1683 = vmatpush1.msra.mxu0 0.0
    %1684 = vmatprep.subr.mxu0 0.0
    %1685 = vmatpush1.msra.mxu0 0.0
    %1686 = vmatprep.mubr.f32.mxu0 0.0
    %1687 = vmatmul.mubr.f32.gmra.mrb[0].mxu0 %v1620
    %v1688 = vpop.f32.mrb[0].mxu0
    %v1689 = vadd.f32 %v391, %v1688
    %v1690 = vpop.f32.mrb[0].mxu0
    %1691 = vdwg.mxu0
    %v1692 = vtanh.pop %v1689
    %v1693 = vmul.f32 %v1692, 0.5
    %v1694 = vadd.f32 %v1693, 0.5
    %v1695 = vmul.f32 %v1694, %v1499
    %1697 = vrot.lane.b32.xlu0 %v1692, 64
    %v1698 = vpop.permute.xlu0 %1697
    %v1700 = vmul.f32 %v1694, %v1698
    %1702 = vrot.lane.b32.xlu0 %v1700, 32
    %v1703 = vpop.permute.xlu0 %1702
    %v1705 = vadd.f32 %v1695, %v1703
    %v1706 = vtanh.pop %v1705
    %1708 = vrot.lane.b32.xlu0 %v1706, 64
    %v1709 = vpop.permute.xlu0 %1708
    %v1711 = vmul.f32 %v1694, %v1709
    %v1712 = vrot.slane %v1607, 4
    %1713 = vrot.lane.b32.xlu0 %v1712, 32
    %v1714 = vpop.permute.xlu0 %1713
    %v1715 = vsel %vm95, %v1714, 0
    %1717 = vmatprep.subr.mxu0 0.0
    %1718 = vmatpush1.msra.mxu0 %v275
    %1719 = vmatprep.subr.mxu0 0.0
    %1720 = vmatpush1.msra.mxu0 %v276
    %1721 = vmatprep.subr.mxu0 0.0
    %1722 = vmatpush1.msra.mxu0 %v277
    %1723 = vmatprep.subr.mxu0 0.0
    %1724 = vmatpush1.msra.mxu0 %v278
    %1725 = vmatprep.subr.mxu0 0.0
    %1726 = vmatpush1.msra.mxu0 0.0
    %1727 = vmatprep.subr.mxu0 0.0
    %1728 = vmatpush1.msra.mxu0 0.0
    %1729 = vmatprep.subr.mxu0 0.0
    %1730 = vmatpush1.msra.mxu0 0.0
    %1731 = vmatprep.subr.mxu0 0.0
    %1732 = vmatpush1.msra.mxu0 0.0
    %1733 = vmatprep.subr.mxu0 0.0
    %1734 = vmatpush1.msra.mxu0 0.0
    %1735 = vmatprep.subr.mxu0 0.0
    %1736 = vmatpush1.msra.mxu0 0.0
    %1737 = vmatprep.subr.mxu0 0.0
    %1738 = vmatpush1.msra.mxu0 0.0
    %1739 = vmatprep.subr.mxu0 0.0
    %1740 = vmatpush1.msra.mxu0 0.0
    %1741 = vmatprep.subr.mxu0 0.0
    %1742 = vmatpush1.msra.mxu0 0.0
    %1743 = vmatprep.subr.mxu0 0.0
    %1744 = vmatpush1.msra.mxu0 0.0
    %1745 = vmatprep.subr.mxu0 0.0
    %1746 = vmatpush1.msra.mxu0 0.0
    %1747 = vmatprep.subr.mxu0 0.0
    %1748 = vmatpush1.msra.mxu0 0.0
    %1749 = vmatprep.subr.mxu0 0.0
    %1750 = vmatpush1.msra.mxu0 0.0
    %1751 = vmatprep.subr.mxu0 0.0
    %1752 = vmatpush1.msra.mxu0 0.0
    %1753 = vmatprep.subr.mxu0 0.0
    %1754 = vmatpush1.msra.mxu0 0.0
    %1755 = vmatprep.subr.mxu0 0.0
    %1756 = vmatpush1.msra.mxu0 0.0
    %1757 = vmatprep.subr.mxu0 0.0
    %1758 = vmatpush1.msra.mxu0 0.0
    %1759 = vmatprep.subr.mxu0 0.0
    %1760 = vmatpush1.msra.mxu0 0.0
    %1761 = vmatprep.subr.mxu0 0.0
    %1762 = vmatpush1.msra.mxu0 0.0
    %1763 = vmatprep.subr.mxu0 0.0
    %1764 = vmatpush1.msra.mxu0 0.0
    %1765 = vmatprep.subr.mxu0 0.0
    %1766 = vmatpush1.msra.mxu0 0.0
    %1767 = vmatprep.subr.mxu0 0.0
    %1768 = vmatpush1.msra.mxu0 0.0
    %1769 = vmatprep.subr.mxu0 0.0
    %1770 = vmatpush1.msra.mxu0 0.0
    %1771 = vmatprep.subr.mxu0 0.0
    %1772 = vmatpush1.msra.mxu0 0.0
    %1773 = vmatprep.subr.mxu0 0.0
    %1774 = vmatpush1.msra.mxu0 0.0
    %1775 = vmatprep.subr.mxu0 0.0
    %1776 = vmatpush1.msra.mxu0 0.0
    %1777 = vmatprep.subr.mxu0 0.0
    %1778 = vmatpush1.msra.mxu0 0.0
    %1779 = vmatprep.subr.mxu0 0.0
    %1780 = vmatpush1.msra.mxu0 0.0
    %1781 = vmatprep.mubr.f32.mxu0 0.0
    %1782 = vmatmul.mubr.f32.gmra.mrb[0].mxu0 %v1715
    %v1783 = vpop.f32.mrb[0].mxu0
    %v1784 = vadd.f32 0.0, %v1783
    %v1785 = vpop.f32.mrb[0].mxu0
    %1786 = vdwg.mxu0
    %v1788 = vrot.slane %v1784, 2
    %v1790 = vadd.f32 %v272, %v1788
    %v1791 = vtanh.pop %v1790
    %v1792 = vmul.f32 %v1791, 0.5
    %v1793 = vadd.f32 %v1792, 0.5
    %v1795 = vrot.slane %v1601, 6
    %v1797 = vmul.f32 %v1793, %v1795
    %1799 = vrot.lane.b32.xlu0 %v1791, 64
    %v1800 = vpop.permute.xlu0 %1799
    %v1802 = vmul.f32 %v1793, %v1800
    %1804 = vrot.lane.b32.xlu0 %v1802, 32
    %v1805 = vpop.permute.xlu0 %1804
    %v1807 = vadd.f32 %v1797, %v1805
    %v1808 = vtanh.pop %v1807
    %1810 = vrot.lane.b32.xlu0 %v1808, 64
    %v1811 = vpop.permute.xlu0 %1810
    %v1813 = vmul.f32 %v1793, %v1811
    %1815 = vrot.lane.b32.xlu0 %v1813, 32
    %v1816 = vpop.permute.xlu0 %1815
    %v1819 = vrot.slane %v1711, 2
    %1820 = vrot.lane.b32.xlu0 %v1819, 64
    %v1821 = vpop.permute.xlu0 %1820
    %v1823 = vsel %vm95, %v1816, %v1821
    %v1825 = vrot.slane %v1823, 6
    %v1826 = vsel %vm393, %v1825, 0
    %1828 = vmatprep.subr.mxu0 0.0
    %1829 = vmatpush1.msra.mxu0 %v279
    %1830 = vmatprep.subr.mxu0 0.0
    %1831 = vmatpush1.msra.mxu0 %v280
    %1832 = vmatprep.subr.mxu0 0.0
    %1833 = vmatpush1.msra.mxu0 %v281
    %1834 = vmatprep.subr.mxu0 0.0
    %1835 = vmatpush1.msra.mxu0 %v282
    %1836 = vmatprep.subr.mxu0 0.0
    %1837 = vmatpush1.msra.mxu0 %v283
    %1838 = vmatprep.subr.mxu0 0.0
    %1839 = vmatpush1.msra.mxu0 %v284
    %1840 = vmatprep.subr.mxu0 0.0
    %1841 = vmatpush1.msra.mxu0 %v285
    %1842 = vmatprep.subr.mxu0 0.0
    %1843 = vmatpush1.msra.mxu0 %v286
    %1844 = vmatprep.subr.mxu0 0.0
    %1845 = vmatpush1.msra.mxu0 0.0
    %1846 = vmatprep.subr.mxu0 0.0
    %1847 = vmatpush1.msra.mxu0 0.0
    %1848 = vmatprep.subr.mxu0 0.0
    %1849 = vmatpush1.msra.mxu0 0.0
    %1850 = vmatprep.subr.mxu0 0.0
    %1851 = vmatpush1.msra.mxu0 0.0
    %1852 = vmatprep.subr.mxu0 0.0
    %1853 = vmatpush1.msra.mxu0 0.0
    %1854 = vmatprep.subr.mxu0 0.0
    %1855 = vmatpush1.msra.mxu0 0.0
    %1856 = vmatprep.subr.mxu0 0.0
    %1857 = vmatpush1.msra.mxu0 0.0
    %1858 = vmatprep.subr.mxu0 0.0
    %1859 = vmatpush1.msra.mxu0 0.0
    %1860 = vmatprep.subr.mxu0 0.0
    %1861 = vmatpush1.msra.mxu0 0.0
    %1862 = vmatprep.subr.mxu0 0.0
    %1863 = vmatpush1.msra.mxu0 0.0
    %1864 = vmatprep.subr.mxu0 0.0
    %1865 = vmatpush1.msra.mxu0 0.0
    %1866 = vmatprep.subr.mxu0 0.0
    %1867 = vmatpush1.msra.mxu0 0.0
    %1868 = vmatprep.subr.mxu0 0.0
    %1869 = vmatpush1.msra.mxu0 0.0
    %1870 = vmatprep.subr.mxu0 0.0
    %1871 = vmatpush1.msra.mxu0 0.0
    %1872 = vmatprep.subr.mxu0 0.0
    %1873 = vmatpush1.msra.mxu0 0.0
    %1874 = vmatprep.subr.mxu0 0.0
    %1875 = vmatpush1.msra.mxu0 0.0
    %1876 = vmatprep.subr.mxu0 0.0
    %1877 = vmatpush1.msra.mxu0 0.0
    %1878 = vmatprep.subr.mxu0 0.0
    %1879 = vmatpush1.msra.mxu0 0.0
    %1880 = vmatprep.subr.mxu0 0.0
    %1881 = vmatpush1.msra.mxu0 0.0
    %1882 = vmatprep.subr.mxu0 0.0
    %1883 = vmatpush1.msra.mxu0 0.0
    %1884 = vmatprep.subr.mxu0 0.0
    %1885 = vmatpush1.msra.mxu0 0.0
    %1886 = vmatprep.subr.mxu0 0.0
    %1887 = vmatpush1.msra.mxu0 0.0
    %1888 = vmatprep.subr.mxu0 0.0
    %1889 = vmatpush1.msra.mxu0 0.0
    %1890 = vmatprep.subr.mxu0 0.0
    %1891 = vmatpush1.msra.mxu0 0.0
    %1892 = vmatprep.mubr.f32.mxu0 0.0
    %1893 = vmatmul.mubr.f32.gmra.mrb[0].mxu0 %v1826
    %v1894 = vpop.f32.mrb[0].mxu0
    %v1895 = vadd.f32 %v391, %v1894
    %v1896 = vpop.f32.mrb[0].mxu0
    %1897 = vdwg.mxu0
    %v1898 = vtanh.pop %v1895
    %v1899 = vmul.f32 %v1898, 0.5
    %v1900 = vadd.f32 %v1899, 0.5
    %v1901 = vmul.f32 %v1900, %v1705
    %1903 = vrot.lane.b32.xlu0 %v1898, 64
    %v1904 = vpop.permute.xlu0 %1903
    %v1906 = vmul.f32 %v1900, %v1904
    %1908 = vrot.lane.b32.xlu0 %v1906, 32
    %v1909 = vpop.permute.xlu0 %1908
    %v1911 = vadd.f32 %v1901, %v1909
    %v1912 = vtanh.pop %v1911
    %1914 = vrot.lane.b32.xlu0 %v1912, 64
    %v1915 = vpop.permute.xlu0 %1914
    %v1917 = vmul.f32 %v1900, %v1915
    %v1918 = vld [vmem:[%s7] sm:$0x1]
    %s1919 = sld [smem:[#allocation2]]
    %v1920 = vstv %s1919
    %1922 = vrot.lane.b32.xlu0 %v1917, 32
    %v1923 = vpop.permute.xlu0 %1922
    %v1925 = vsel %vm95, %v1918, 0
    %v1927 = vsel %vm95, %v1923, 0
    %1929 = vmatprep.subr.mxu0 0.0
    %1930 = vmatpush1.xpose.msra.mxu0 %v1927
    %1931 = vmatprep.subr.mxu0 0.0
    %1932 = vmatpush1.xpose.msra.mxu0 0.0
    %1933 = vmatprep.subr.mxu0 0.0
    %1934 = vmatpush1.xpose.msra.mxu0 0.0
    %1935 = vmatprep.subr.mxu0 0.0
    %1936 = vmatpush1.xpose.msra.mxu0 0.0
    %1937 = vmatprep.subr.mxu0 0.0
    %1938 = vmatpush1.xpose.msra.mxu0 0.0
    %1939 = vmatprep.subr.mxu0 0.0
    %1940 = vmatpush1.xpose.msra.mxu0 0.0
    %1941 = vmatprep.subr.mxu0 0.0
    %1942 = vmatpush1.xpose.msra.mxu0 0.0
    %1943 = vmatprep.subr.mxu0 0.0
    %1944 = vmatpush1.xpose.msra.mxu0 0.0
    %1945 = vmatprep.subr.mxu0 0.0
    %1946 = vmatpush1.xpose.msra.mxu0 0.0
    %1947 = vmatprep.subr.mxu0 0.0
    %1948 = vmatpush1.xpose.msra.mxu0 0.0
    %1949 = vmatprep.subr.mxu0 0.0
    %1950 = vmatpush1.xpose.msra.mxu0 0.0
    %1951 = vmatprep.subr.mxu0 0.0
    %1952 = vmatpush1.xpose.msra.mxu0 0.0
    %1953 = vmatprep.subr.mxu0 0.0
    %1954 = vmatpush1.xpose.msra.mxu0 0.0
    %1955 = vmatprep.subr.mxu0 0.0
    %1956 = vmatpush1.xpose.msra.mxu0 0.0
    %1957 = vmatprep.subr.mxu0 0.0
    %1958 = vmatpush1.xpose.msra.mxu0 0.0
    %1959 = vmatprep.subr.mxu0 0.0
    %1960 = vmatpush1.xpose.msra.mxu0 0.0
    %1961 = vmatprep.subr.mxu0 0.0
    %1962 = vmatpush1.xpose.msra.mxu0 0.0
    %1963 = vmatprep.subr.mxu0 0.0
    %1964 = vmatpush1.xpose.msra.mxu0 0.0
    %1965 = vmatprep.subr.mxu0 0.0
    %1966 = vmatpush1.xpose.msra.mxu0 0.0
    %1967 = vmatprep.subr.mxu0 0.0
    %1968 = vmatpush1.xpose.msra.mxu0 0.0
    %1969 = vmatprep.subr.mxu0 0.0
    %1970 = vmatpush1.xpose.msra.mxu0 0.0
    %1971 = vmatprep.subr.mxu0 0.0
    %1972 = vmatpush1.xpose.msra.mxu0 0.0
    %1973 = vmatprep.subr.mxu0 0.0
    %1974 = vmatpush1.xpose.msra.mxu0 0.0
    %1975 = vmatprep.subr.mxu0 0.0
    %1976 = vmatpush1.xpose.msra.mxu0 0.0
    %1977 = vmatprep.subr.mxu0 0.0
    %1978 = vmatpush1.xpose.msra.mxu0 0.0
    %1979 = vmatprep.subr.mxu0 0.0
    %1980 = vmatpush1.xpose.msra.mxu0 0.0
    %1981 = vmatprep.subr.mxu0 0.0
    %1982 = vmatpush1.xpose.msra.mxu0 0.0
    %1983 = vmatprep.subr.mxu0 0.0
    %1984 = vmatpush1.xpose.msra.mxu0 0.0
    %1985 = vmatprep.subr.mxu0 0.0
    %1986 = vmatpush1.xpose.msra.mxu0 0.0
    %1987 = vmatprep.subr.mxu0 0.0
    %1988 = vmatpush1.xpose.msra.mxu0 0.0
    %1989 = vmatprep.subr.mxu0 0.0
    %1990 = vmatpush1.xpose.msra.mxu0 0.0
    %1991 = vmatprep.subr.mxu0 0.0
    %1992 = vmatpush1.xpose.msra.mxu0 0.0
    %1993 = vmatprep.mubr.f32.mxu0 0.0
    %1994 = vmatmul.mubr.f32.gmra.mrb[0].mxu0 %v1925
    %v1995 = vpop.f32.mrb[0].mxu0
    %v1996 = vadd.f32 %v1920, %v1995
    %v1997 = vpop.f32.mrb[0].mxu0
    %1998 = vdwg.mxu0
    %v1999 = vmul.f32 %v1996, 0.5
    %v2000 = vtanh.pop %v1999
    %v2001 = vmul.f32 %v2000, 0.5
    %v2002 = vadd.f32 %v2001, 0.5
    %vm2003 = vcmask 8192
    %2004 = vst.msk [vmem:[#allocation9] sm:$0x1] %vm2003, %v2002
    // Predicated region
    $region50: #{lstm_forward.1} parent=1 // pred_check
      _
    $region51: #{lstm_forward.1} parent=1 // pred_check_branch
      %2006 = sbr.rel (0) target = $region53
    $region52: #{lstm_forward.1} parent=1 // pred_region
      %s2008 = ssub.s32 16, 16
      %2009 = vsyncadd [#allocation5], %s2008
      %s2011 = sshll.u32 [#allocation9], 4
      %s2012 = int_to_ptr.vmem [resolvable:$true] %s2011
      %2014 = dma.vmem_to_hbm [thread:$0]  %s2012, 16, %s9, [#allocation5]
    $region53: #{lstm_forward.1} parent=1 // pred_fallthru
      _
    // Predicated region
    $region54: #{lstm_forward.1} parent=1 // pred_check
      _
    $region55: #{lstm_forward.1} parent=1 // pred_check_branch
      %2016 = sbr.rel (0) target = $region57
    $region56: #{lstm_forward.1} parent=1 // pred_region
      %2017 = dma.done [#allocation5], 16
    $region57: #{lstm_forward.1} parent=1 // pred_fallthru
      _
    %2018 = vsyncpa [#allocation4], 1
    %2019 = vsyncpa [#allocation7], 1
    %2020 = vsyncpa [#allocation5], 1

</llo_original>
